<compile_context>
chip_gen: v5e
topology: v5e:2x2
jax: 0.10.0
libtpu: 0.0.40
codegen_flags: <defaults>
</compile_context>

<pallas_src>
import jax
import jax.numpy as jnp
from jax import lax
from jax.experimental import pallas as pl
from jax.experimental.pallas import tpu as pltpu

H = 36
W = 36
HW = H * W            # 1296 flat elements per channel
C_OUT = 117           # 3 * 39 output channels
CHUNK = 40            # output channels per grid step (multiple of 8)
N_STEPS = 3           # ceil(117 / 40)
XROWS = 32            # x spatial rows
XCOLS = 32            # x spatial cols


def _mixed_chunk_kernel(x_ref, tbl_ref, base_ref, o_ref):
    """One grid step = one 40-channel chunk of the (117, 1296) output.

    base_ref already holds the final values (const + gather offset) of every
    constant channel, and the x-independent (pre-flattened) part of y in the
    first y slot.  Step 1 (global channels 40:80) stitches x into that slot,
    runs argmax + gather + add on the 16 unique y channels, and writes the
    result to both duplicated y slots.
    """
    # Dense copy of the precomputed constant channels / y scaffolding.
    o_ref[...] = base_ref[...]

    @pl.when(pl.program_id(0) == 1)
    def _():
        # --- stitch x into y (global channels 40:56 -> chunk-local 0:16) ---
        # x row r lands at y row r+1, cols 4:36  <->  flat lanes
        # 36*(r+1)+4 : 36*(r+1)+36 (static lane-offset VMEM stores).
        for r in range(XROWS):
            off = 36 * (r + 1) + 4
            o_ref[0:16, off:off + XCOLS] = x_ref[:, XCOLS * r:XCOLS * (r + 1)]

        seg = o_ref[0:16, :]                                     # (16,1296) = y
        tbl = tbl_ref[...]                                       # (1,1296)

        # per-channel max over the flat slab (lane-dense cross-lane reduce)
        m = jnp.max(seg, axis=-1, keepdims=True)                 # (16,1)

        # first index achieving the max (torch.argmax tie-break = first hit)
        flat_i = lax.broadcasted_iota(jnp.int32, seg.shape, 1)   # (16,1296)
        masked = jnp.where(seg == m, flat_i, jnp.int32(HW))
        inds = jnp.min(masked, axis=-1, keepdims=True)           # (16,1)

        # torch.gather(gather_const, 1, inds) as a one-hot select + row sum
        # (exact: flat indices are unique, exactly one lane survives).
        sel = jnp.where(flat_i == inds, tbl, jnp.float32(0.0))   # (16,1296)
        b = jnp.sum(sel, axis=-1, keepdims=True)                 # (16,1)

        y_out = seg + b
        o_ref[0:16, :] = y_out        # global channels 40:56
        o_ref[18:34, :] = y_out       # global channels 58:74 (duplicated y)


def make_forward(cat_const_1, cat_const_2, concat_const_1,
                 concatenate_const_1, concatenate_const_2, concatenate_const_3,
                 stack_const_1, stack_const_2, gather_const):
    """Precompute (eagerly, once) the constant channels and return forward(x)."""
    f32 = jnp.float32

    cc1 = concatenate_const_1[0].reshape(1, HW).astype(f32)
    cc2 = concatenate_const_2[0].reshape(2, HW).astype(f32)
    cc3 = concatenate_const_3[0].reshape(3, HW).astype(f32)
    sc1 = stack_const_1[0].reshape(39, HW).astype(f32)
    sc2 = stack_const_2[0].reshape(39, HW).astype(f32)
    gc = gather_const[0].astype(f32)                      # (2592,)
    # argmax indices live in [0, 1296): only the first HW entries are reachable.
    tbl = gc[:HW].reshape(1, HW)

    def add_gather_offset(seg):
        # first-max index (matches torch.argmax tie-breaking), then gather + add
        inds = jnp.argmax(seg, axis=1)
        return seg + gc[inds][:, None]

    # x-independent part of y, flattened (stitching constants with x := 0)
    a0 = jnp.concatenate(
        [cat_const_1, jnp.zeros((1, 16, XROWS, XCOLS), f32), cat_const_2],
        axis=2)
    y0 = jnp.concatenate([concat_const_1, a0], axis=3)[0].reshape(16, HW)

    # Channel layout of reshape(stack([sc1, z, sc2], 1), (1,117,36,36)):
    #   [ sc1(0:39) | cc1(39) y(40:56) cc2(56:58) y(58:74) cc3(74:77) cc1(77) | sc2(78:117) ]
    base = jnp.zeros((C_OUT, HW), f32)
    base = base.at[0:39].set(add_gather_offset(sc1))       # stack_const_1
    base = base.at[39:40].set(add_gather_offset(cc1))      # concatenate_const_1
    base = base.at[40:56].set(y0)                          # y scaffolding (slot 1)
    base = base.at[56:58].set(add_gather_offset(cc2))      # concatenate_const_2
    # 58:74 (y slot 2) is fully overwritten in-kernel
    base = base.at[74:77].set(add_gather_offset(cc3))      # concatenate_const_3
    base = base.at[77:78].set(add_gather_offset(cc1))      # concatenate_const_1
    base = base.at[78:117].set(add_gather_offset(sc2))     # stack_const_2
    base = jax.device_put(base)
    tbl = jax.device_put(tbl)

    grid_spec = pltpu.PrefetchScalarGridSpec(
        num_scalar_prefetch=0,
        grid=(N_STEPS,),
        in_specs=[
            pl.BlockSpec((16, XROWS * XCOLS), lambda i: (0, 0)),  # x, flattened
            pl.BlockSpec((1, HW), lambda i: (0, 0)),              # gather table
            pl.BlockSpec((CHUNK, HW), lambda i: (i, 0)),          # base chunk
        ],
        out_specs=pl.BlockSpec((CHUNK, HW), lambda i: (i, 0)),
    )

    call = pl.pallas_call(
        _mixed_chunk_kernel,
        out_shape=jax.ShapeDtypeStruct((C_OUT, HW), f32),
        grid_spec=grid_spec,
        compiler_params=pltpu.CompilerParams(
            dimension_semantics=("parallel",),   # v7x: chunks split across TCs
            vmem_limit_bytes=32 * 1024 * 1024),
        cost_estimate=pl.CostEstimate(
            flops=16 * HW * 8 + C_OUT * HW,
            transcendentals=0,
            bytes_accessed=(16 * XROWS * XCOLS + HW + 2 * C_OUT * HW) * 4),
    )

    @jax.jit
    def forward(x):
        x_flat = x.reshape(16, XROWS * XCOLS)        # contiguous -> free
        out = call(x_flat, tbl, base)
        return out.reshape(1, C_OUT, H, W)           # contiguous -> free

    return forward


if __name__ == "__main__":
    key = jax.random.PRNGKey(0)
    keys = jax.random.split(key, 10)

    def rnd(k, shape):
        # np.random.randint(-128, 127)-style buffers, stored as float32
        return jax.random.randint(k, shape, -128, 127).astype(jnp.float32)

    x = rnd(keys[0], (1, 16, 32, 32))
    cat_const_1 = rnd(keys[1], (1, 16, 1, 32))
    cat_const_2 = rnd(keys[2], (1, 16, 3, 32))
    concat_const_1 = rnd(keys[3], (1, 16, 36, 4))
    concatenate_const_1 = rnd(keys[4], (1, 1, 36, 36))
    concatenate_const_2 = rnd(keys[5], (1, 2, 36, 36))
    concatenate_const_3 = rnd(keys[6], (1, 3, 36, 36))
    stack_const_1 = rnd(keys[7], (1, 39, 36, 36))
    stack_const_2 = rnd(keys[8], (1, 39, 36, 36))
    gather_const = rnd(keys[9], (1, 2 * 36 * 36))

    forward = make_forward(cat_const_1, cat_const_2, concat_const_1,
                           concatenate_const_1, concatenate_const_2,
                           concatenate_const_3, stack_const_1, stack_const_2,
                           gather_const)
    out = jax.block_until_ready(forward(x))

    # Pure-JAX reference with the exact torch forward semantics.
    a = jnp.concatenate([cat_const_1, x, cat_const_2], axis=2)
    y = jnp.concatenate([concat_const_1, a], axis=3)
    z = jnp.concatenate([concatenate_const_1, y, concatenate_const_2, y,
                         concatenate_const_3, concatenate_const_1], axis=1)
    s = jnp.stack([stack_const_1, z, stack_const_2], axis=1)
    big = jnp.reshape(s, (1, C_OUT, H, W))
    inds = jnp.argmax(jnp.reshape(big, (-1, C_OUT, HW)), axis=2)
    b = jnp.take_along_axis(gather_const, inds, axis=1).reshape(-1, C_OUT, 1, 1)
    ref = big + b

    assert out.shape == (1, C_OUT, H, W), out.shape
    assert jnp.array_equal(out, ref), "mismatch vs reference"
    print("KERNEL_OK")
</pallas_src>

<mosaic_0001>
module attributes {stable_mosaic.version = 11 : i64} {
  func.func @_mixed_chunk_kernel(%arg0: i32, %arg1: memref<16x1024xf32, #tpu.memory_space<vmem>>, %arg2: memref<1x1296xf32, #tpu.memory_space<vmem>>, %arg3: memref<40x1296xf32, #tpu.memory_space<vmem>>, %arg4: memref<40x1296xf32, #tpu.memory_space<vmem>>) attributes {dimension_semantics = [#tpu.dimension_semantics<parallel>], iteration_bounds = array<i64: 3>, scalar_prefetch = 0 : i64, scratch_operands = 0 : i64, tpu.core_type = #tpu.core_type<tc>, window_params = [{pipeline_mode = #tpu.pipeline_mode<synchronous>, transform_indices = @transform_0, window_bounds = array<i64: 16, 1024>}, {pipeline_mode = #tpu.pipeline_mode<synchronous>, transform_indices = @transform_1, window_bounds = array<i64: 1, 1296>}, {transform_indices = @transform_2, window_bounds = array<i64: 40, 1296>}, {transform_indices = @transform_3, window_bounds = array<i64: 40, 1296>}]} {
    %c0 = arith.constant 0 : index
    %c0_0 = arith.constant 0 : index
    %0 = vector.load %arg3[%c0, %c0_0] : memref<40x1296xf32, #tpu.memory_space<vmem>>, vector<40x1296xf32>
    %c0_1 = arith.constant 0 : index
    %c0_2 = arith.constant 0 : index
    %1 = vector.load %arg4[%c0_1, %c0_2] : memref<40x1296xf32, #tpu.memory_space<vmem>>, vector<40x1296xf32>
    tpu.vector_store %arg4[%c0_1, %c0_2], %0 {strides = array<i32>} : memref<40x1296xf32, #tpu.memory_space<vmem>>, vector<40x1296xf32>,
    %c1_i32 = arith.constant 1 : i32
    %2 = arith.cmpi eq, %arg0, %c1_i32 : i32
    %3 = arith.extui %2 : i1 to i32
    %c0_i32 = arith.constant 0 : i32
    %4 = arith.cmpi ne, %3, %c0_i32 : i32
    scf.if %4 {
      %c0_3 = arith.constant 0 : index
      %c0_4 = arith.constant 0 : index
      %5 = vector.load %arg1[%c0_3, %c0_4] : memref<16x1024xf32, #tpu.memory_space<vmem>>, vector<16x32xf32>
      %c0_5 = arith.constant 0 : index
      %c40 = arith.constant 40 : index
      %6 = vector.load %arg4[%c0_5, %c40] : memref<40x1296xf32, #tpu.memory_space<vmem>>, vector<16x32xf32>
      tpu.vector_store %arg4[%c0_5, %c40], %5 {strides = array<i32>} : memref<40x1296xf32, #tpu.memory_space<vmem>>, vector<16x32xf32>,
      %c0_6 = arith.constant 0 : index
      %c32 = arith.constant 32 : index
      %7 = vector.load %arg1[%c0_6, %c32] : memref<16x1024xf32, #tpu.memory_space<vmem>>, vector<16x32xf32>
      %c0_7 = arith.constant 0 : index
      %c76 = arith.constant 76 : index
      %8 = vector.load %arg4[%c0_7, %c76] : memref<40x1296xf32, #tpu.memory_space<vmem>>, vector<16x32xf32>
      tpu.vector_store %arg4[%c0_7, %c76], %7 {strides = array<i32>} : memref<40x1296xf32, #tpu.memory_space<vmem>>, vector<16x32xf32>,
      %c0_8 = arith.constant 0 : index
      %c64 = arith.constant 64 : index
      %9 = vector.load %arg1[%c0_8, %c64] : memref<16x1024xf32, #tpu.memory_space<vmem>>, vector<16x32xf32>
      %c0_9 = arith.constant 0 : index
      %c112 = arith.constant 112 : index
      %10 = vector.load %arg4[%c0_9, %c112] : memref<40x1296xf32, #tpu.memory_space<vmem>>, vector<16x32xf32>
      tpu.vector_store %arg4[%c0_9, %c112], %9 {strides = array<i32>} : memref<40x1296xf32, #tpu.memory_space<vmem>>, vector<16x32xf32>,
      %c0_10 = arith.constant 0 : index
      %c96 = arith.constant 96 : index
      %11 = vector.load %arg1[%c0_10, %c96] : memref<16x1024xf32, #tpu.memory_space<vmem>>, vector<16x32xf32>
      %c0_11 = arith.constant 0 : index
      %c148 = arith.constant 148 : index
      %12 = vector.load %arg4[%c0_11, %c148] : memref<40x1296xf32, #tpu.memory_space<vmem>>, vector<16x32xf32>
      tpu.vector_store %arg4[%c0_11, %c148], %11 {strides = array<i32>} : memref<40x1296xf32, #tpu.memory_space<vmem>>, vector<16x32xf32>,
      %c0_12 = arith.constant 0 : index
      %c128 = arith.constant 128 : index
      %13 = vector.load %arg1[%c0_12, %c128] : memref<16x1024xf32, #tpu.memory_space<vmem>>, vector<16x32xf32>
      %c0_13 = arith.constant 0 : index
      %c184 = arith.constant 184 : index
      %14 = vector.load %arg4[%c0_13, %c184] : memref<40x1296xf32, #tpu.memory_space<vmem>>, vector<16x32xf32>
      tpu.vector_store %arg4[%c0_13, %c184], %13 {strides = array<i32>} : memref<40x1296xf32, #tpu.memory_space<vmem>>, vector<16x32xf32>,
      %c0_14 = arith.constant 0 : index
      %c160 = arith.constant 160 : index
      %15 = vector.load %arg1[%c0_14, %c160] : memref<16x1024xf32, #tpu.memory_space<vmem>>, vector<16x32xf32>
      %c0_15 = arith.constant 0 : index
      %c220 = arith.constant 220 : index
      %16 = vector.load %arg4[%c0_15, %c220] : memref<40x1296xf32, #tpu.memory_space<vmem>>, vector<16x32xf32>
      tpu.vector_store %arg4[%c0_15, %c220], %15 {strides = array<i32>} : memref<40x1296xf32, #tpu.memory_space<vmem>>, vector<16x32xf32>,
      %c0_16 = arith.constant 0 : index
      %c192 = arith.constant 192 : index
      %17 = vector.load %arg1[%c0_16, %c192] : memref<16x1024xf32, #tpu.memory_space<vmem>>, vector<16x32xf32>
      %c0_17 = arith.constant 0 : index
      %c256 = arith.constant 256 : index
      %18 = vector.load %arg4[%c0_17, %c256] : memref<40x1296xf32, #tpu.memory_space<vmem>>, vector<16x32xf32>
      tpu.vector_store %arg4[%c0_17, %c256], %17 {strides = array<i32>} : memref<40x1296xf32, #tpu.memory_space<vmem>>, vector<16x32xf32>,
      %c0_18 = arith.constant 0 : index
      %c224 = arith.constant 224 : index
      %19 = vector.load %arg1[%c0_18, %c224] : memref<16x1024xf32, #tpu.memory_space<vmem>>, vector<16x32xf32>
      %c0_19 = arith.constant 0 : index
      %c292 = arith.constant 292 : index
      %20 = vector.load %arg4[%c0_19, %c292] : memref<40x1296xf32, #tpu.memory_space<vmem>>, vector<16x32xf32>
      tpu.vector_store %arg4[%c0_19, %c292], %19 {strides = array<i32>} : memref<40x1296xf32, #tpu.memory_space<vmem>>, vector<16x32xf32>,
      %c0_20 = arith.constant 0 : index
      %c256_21 = arith.constant 256 : index
      %21 = vector.load %arg1[%c0_20, %c256_21] : memref<16x1024xf32, #tpu.memory_space<vmem>>, vector<16x32xf32>
      %c0_22 = arith.constant 0 : index
      %c328 = arith.constant 328 : index
      %22 = vector.load %arg4[%c0_22, %c328] : memref<40x1296xf32, #tpu.memory_space<vmem>>, vector<16x32xf32>
      tpu.vector_store %arg4[%c0_22, %c328], %21 {strides = array<i32>} : memref<40x1296xf32, #tpu.memory_space<vmem>>, vector<16x32xf32>,
      %c0_23 = arith.constant 0 : index
      %c288 = arith.constant 288 : index
      %23 = vector.load %arg1[%c0_23, %c288] : memref<16x1024xf32, #tpu.memory_space<vmem>>, vector<16x32xf32>
      %c0_24 = arith.constant 0 : index
      %c364 = arith.constant 364 : index
      %24 = vector.load %arg4[%c0_24, %c364] : memref<40x1296xf32, #tpu.memory_space<vmem>>, vector<16x32xf32>
      tpu.vector_store %arg4[%c0_24, %c364], %23 {strides = array<i32>} : memref<40x1296xf32, #tpu.memory_space<vmem>>, vector<16x32xf32>,
      %c0_25 = arith.constant 0 : index
      %c320 = arith.constant 320 : index
      %25 = vector.load %arg1[%c0_25, %c320] : memref<16x1024xf32, #tpu.memory_space<vmem>>, vector<16x32xf32>
      %c0_26 = arith.constant 0 : index
      %c400 = arith.constant 400 : index
      %26 = vector.load %arg4[%c0_26, %c400] : memref<40x1296xf32, #tpu.memory_space<vmem>>, vector<16x32xf32>
      tpu.vector_store %arg4[%c0_26, %c400], %25 {strides = array<i32>} : memref<40x1296xf32, #tpu.memory_space<vmem>>, vector<16x32xf32>,
      %c0_27 = arith.constant 0 : index
      %c352 = arith.constant 352 : index
      %27 = vector.load %arg1[%c0_27, %c352] : memref<16x1024xf32, #tpu.memory_space<vmem>>, vector<16x32xf32>
      %c0_28 = arith.constant 0 : index
      %c436 = arith.constant 436 : index
      %28 = vector.load %arg4[%c0_28, %c436] : memref<40x1296xf32, #tpu.memory_space<vmem>>, vector<16x32xf32>
      tpu.vector_store %arg4[%c0_28, %c436], %27 {strides = array<i32>} : memref<40x1296xf32, #tpu.memory_space<vmem>>, vector<16x32xf32>,
      %c0_29 = arith.constant 0 : index
      %c384 = arith.constant 384 : index
      %29 = vector.load %arg1[%c0_29, %c384] : memref<16x1024xf32, #tpu.memory_space<vmem>>, vector<16x32xf32>
      %c0_30 = arith.constant 0 : index
      %c472 = arith.constant 472 : index
      %30 = vector.load %arg4[%c0_30, %c472] : memref<40x1296xf32, #tpu.memory_space<vmem>>, vector<16x32xf32>
      tpu.vector_store %arg4[%c0_30, %c472], %29 {strides = array<i32>} : memref<40x1296xf32, #tpu.memory_space<vmem>>, vector<16x32xf32>,
      %c0_31 = arith.constant 0 : index
      %c416 = arith.constant 416 : index
      %31 = vector.load %arg1[%c0_31, %c416] : memref<16x1024xf32, #tpu.memory_space<vmem>>, vector<16x32xf32>
      %c0_32 = arith.constant 0 : index
      %c508 = arith.constant 508 : index
      %32 = vector.load %arg4[%c0_32, %c508] : memref<40x1296xf32, #tpu.memory_space<vmem>>, vector<16x32xf32>
      tpu.vector_store %arg4[%c0_32, %c508], %31 {strides = array<i32>} : memref<40x1296xf32, #tpu.memory_space<vmem>>, vector<16x32xf32>,
      %c0_33 = arith.constant 0 : index
      %c448 = arith.constant 448 : index
      %33 = vector.load %arg1[%c0_33, %c448] : memref<16x1024xf32, #tpu.memory_space<vmem>>, vector<16x32xf32>
      %c0_34 = arith.constant 0 : index
      %c544 = arith.constant 544 : index
      %34 = vector.load %arg4[%c0_34, %c544] : memref<40x1296xf32, #tpu.memory_space<vmem>>, vector<16x32xf32>
      tpu.vector_store %arg4[%c0_34, %c544], %33 {strides = array<i32>} : memref<40x1296xf32, #tpu.memory_space<vmem>>, vector<16x32xf32>,
      %c0_35 = arith.constant 0 : index
      %c480 = arith.constant 480 : index
      %35 = vector.load %arg1[%c0_35, %c480] : memref<16x1024xf32, #tpu.memory_space<vmem>>, vector<16x32xf32>
      %c0_36 = arith.constant 0 : index
      %c580 = arith.constant 580 : index
      %36 = vector.load %arg4[%c0_36, %c580] : memref<40x1296xf32, #tpu.memory_space<vmem>>, vector<16x32xf32>
      tpu.vector_store %arg4[%c0_36, %c580], %35 {strides = array<i32>} : memref<40x1296xf32, #tpu.memory_space<vmem>>, vector<16x32xf32>,
      %c0_37 = arith.constant 0 : index
      %c512 = arith.constant 512 : index
      %37 = vector.load %arg1[%c0_37, %c512] : memref<16x1024xf32, #tpu.memory_space<vmem>>, vector<16x32xf32>
      %c0_38 = arith.constant 0 : index
      %c616 = arith.constant 616 : index
      %38 = vector.load %arg4[%c0_38, %c616] : memref<40x1296xf32, #tpu.memory_space<vmem>>, vector<16x32xf32>
      tpu.vector_store %arg4[%c0_38, %c616], %37 {strides = array<i32>} : memref<40x1296xf32, #tpu.memory_space<vmem>>, vector<16x32xf32>,
      %c0_39 = arith.constant 0 : index
      %c544_40 = arith.constant 544 : index
      %39 = vector.load %arg1[%c0_39, %c544_40] : memref<16x1024xf32, #tpu.memory_space<vmem>>, vector<16x32xf32>
      %c0_41 = arith.constant 0 : index
      %c652 = arith.constant 652 : index
      %40 = vector.load %arg4[%c0_41, %c652] : memref<40x1296xf32, #tpu.memory_space<vmem>>, vector<16x32xf32>
      tpu.vector_store %arg4[%c0_41, %c652], %39 {strides = array<i32>} : memref<40x1296xf32, #tpu.memory_space<vmem>>, vector<16x32xf32>,
      %c0_42 = arith.constant 0 : index
      %c576 = arith.constant 576 : index
      %41 = vector.load %arg1[%c0_42, %c576] : memref<16x1024xf32, #tpu.memory_space<vmem>>, vector<16x32xf32>
      %c0_43 = arith.constant 0 : index
      %c688 = arith.constant 688 : index
      %42 = vector.load %arg4[%c0_43, %c688] : memref<40x1296xf32, #tpu.memory_space<vmem>>, vector<16x32xf32>
      tpu.vector_store %arg4[%c0_43, %c688], %41 {strides = array<i32>} : memref<40x1296xf32, #tpu.memory_space<vmem>>, vector<16x32xf32>,
      %c0_44 = arith.constant 0 : index
      %c608 = arith.constant 608 : index
      %43 = vector.load %arg1[%c0_44, %c608] : memref<16x1024xf32, #tpu.memory_space<vmem>>, vector<16x32xf32>
      %c0_45 = arith.constant 0 : index
      %c724 = arith.constant 724 : index
      %44 = vector.load %arg4[%c0_45, %c724] : memref<40x1296xf32, #tpu.memory_space<vmem>>, vector<16x32xf32>
      tpu.vector_store %arg4[%c0_45, %c724], %43 {strides = array<i32>} : memref<40x1296xf32, #tpu.memory_space<vmem>>, vector<16x32xf32>,
      %c0_46 = arith.constant 0 : index
      %c640 = arith.constant 640 : index
      %45 = vector.load %arg1[%c0_46, %c640] : memref<16x1024xf32, #tpu.memory_space<vmem>>, vector<16x32xf32>
      %c0_47 = arith.constant 0 : index
      %c760 = arith.constant 760 : index
      %46 = vector.load %arg4[%c0_47, %c760] : memref<40x1296xf32, #tpu.memory_space<vmem>>, vector<16x32xf32>
      tpu.vector_store %arg4[%c0_47, %c760], %45 {strides = array<i32>} : memref<40x1296xf32, #tpu.memory_space<vmem>>, vector<16x32xf32>,
      %c0_48 = arith.constant 0 : index
      %c672 = arith.constant 672 : index
      %47 = vector.load %arg1[%c0_48, %c672] : memref<16x1024xf32, #tpu.memory_space<vmem>>, vector<16x32xf32>
      %c0_49 = arith.constant 0 : index
      %c796 = arith.constant 796 : index
      %48 = vector.load %arg4[%c0_49, %c796] : memref<40x1296xf32, #tpu.memory_space<vmem>>, vector<16x32xf32>
      tpu.vector_store %arg4[%c0_49, %c796], %47 {strides = array<i32>} : memref<40x1296xf32, #tpu.memory_space<vmem>>, vector<16x32xf32>,
      %c0_50 = arith.constant 0 : index
      %c704 = arith.constant 704 : index
      %49 = vector.load %arg1[%c0_50, %c704] : memref<16x1024xf32, #tpu.memory_space<vmem>>, vector<16x32xf32>
      %c0_51 = arith.constant 0 : index
      %c832 = arith.constant 832 : index
      %50 = vector.load %arg4[%c0_51, %c832] : memref<40x1296xf32, #tpu.memory_space<vmem>>, vector<16x32xf32>
      tpu.vector_store %arg4[%c0_51, %c832], %49 {strides = array<i32>} : memref<40x1296xf32, #tpu.memory_space<vmem>>, vector<16x32xf32>,
      %c0_52 = arith.constant 0 : index
      %c736 = arith.constant 736 : index
      %51 = vector.load %arg1[%c0_52, %c736] : memref<16x1024xf32, #tpu.memory_space<vmem>>, vector<16x32xf32>
      %c0_53 = arith.constant 0 : index
      %c868 = arith.constant 868 : index
      %52 = vector.load %arg4[%c0_53, %c868] : memref<40x1296xf32, #tpu.memory_space<vmem>>, vector<16x32xf32>
      tpu.vector_store %arg4[%c0_53, %c868], %51 {strides = array<i32>} : memref<40x1296xf32, #tpu.memory_space<vmem>>, vector<16x32xf32>,
      %c0_54 = arith.constant 0 : index
      %c768 = arith.constant 768 : index
      %53 = vector.load %arg1[%c0_54, %c768] : memref<16x1024xf32, #tpu.memory_space<vmem>>, vector<16x32xf32>
      %c0_55 = arith.constant 0 : index
      %c904 = arith.constant 904 : index
      %54 = vector.load %arg4[%c0_55, %c904] : memref<40x1296xf32, #tpu.memory_space<vmem>>, vector<16x32xf32>
      tpu.vector_store %arg4[%c0_55, %c904], %53 {strides = array<i32>} : memref<40x1296xf32, #tpu.memory_space<vmem>>, vector<16x32xf32>,
      %c0_56 = arith.constant 0 : index
      %c800 = arith.constant 800 : index
      %55 = vector.load %arg1[%c0_56, %c800] : memref<16x1024xf32, #tpu.memory_space<vmem>>, vector<16x32xf32>
      %c0_57 = arith.constant 0 : index
      %c940 = arith.constant 940 : index
      %56 = vector.load %arg4[%c0_57, %c940] : memref<40x1296xf32, #tpu.memory_space<vmem>>, vector<16x32xf32>
      tpu.vector_store %arg4[%c0_57, %c940], %55 {strides = array<i32>} : memref<40x1296xf32, #tpu.memory_space<vmem>>, vector<16x32xf32>,
      %c0_58 = arith.constant 0 : index
      %c832_59 = arith.constant 832 : index
      %57 = vector.load %arg1[%c0_58, %c832_59] : memref<16x1024xf32, #tpu.memory_space<vmem>>, vector<16x32xf32>
      %c0_60 = arith.constant 0 : index
      %c976 = arith.constant 976 : index
      %58 = vector.load %arg4[%c0_60, %c976] : memref<40x1296xf32, #tpu.memory_space<vmem>>, vector<16x32xf32>
      tpu.vector_store %arg4[%c0_60, %c976], %57 {strides = array<i32>} : memref<40x1296xf32, #tpu.memory_space<vmem>>, vector<16x32xf32>,
      %c0_61 = arith.constant 0 : index
      %c864 = arith.constant 864 : index
      %59 = vector.load %arg1[%c0_61, %c864] : memref<16x1024xf32, #tpu.memory_space<vmem>>, vector<16x32xf32>
      %c0_62 = arith.constant 0 : index
      %c1012 = arith.constant 1012 : index
      %60 = vector.load %arg4[%c0_62, %c1012] : memref<40x1296xf32, #tpu.memory_space<vmem>>, vector<16x32xf32>
      tpu.vector_store %arg4[%c0_62, %c1012], %59 {strides = array<i32>} : memref<40x1296xf32, #tpu.memory_space<vmem>>, vector<16x32xf32>,
      %c0_63 = arith.constant 0 : index
      %c896 = arith.constant 896 : index
      %61 = vector.load %arg1[%c0_63, %c896] : memref<16x1024xf32, #tpu.memory_space<vmem>>, vector<16x32xf32>
      %c0_64 = arith.constant 0 : index
      %c1048 = arith.constant 1048 : index
      %62 = vector.load %arg4[%c0_64, %c1048] : memref<40x1296xf32, #tpu.memory_space<vmem>>, vector<16x32xf32>
      tpu.vector_store %arg4[%c0_64, %c1048], %61 {strides = array<i32>} : memref<40x1296xf32, #tpu.memory_space<vmem>>, vector<16x32xf32>,
      %c0_65 = arith.constant 0 : index
      %c928 = arith.constant 928 : index
      %63 = vector.load %arg1[%c0_65, %c928] : memref<16x1024xf32, #tpu.memory_space<vmem>>, vector<16x32xf32>
      %c0_66 = arith.constant 0 : index
      %c1084 = arith.constant 1084 : index
      %64 = vector.load %arg4[%c0_66, %c1084] : memref<40x1296xf32, #tpu.memory_space<vmem>>, vector<16x32xf32>
      tpu.vector_store %arg4[%c0_66, %c1084], %63 {strides = array<i32>} : memref<40x1296xf32, #tpu.memory_space<vmem>>, vector<16x32xf32>,
      %c0_67 = arith.constant 0 : index
      %c960 = arith.constant 960 : index
      %65 = vector.load %arg1[%c0_67, %c960] : memref<16x1024xf32, #tpu.memory_space<vmem>>, vector<16x32xf32>
      %c0_68 = arith.constant 0 : index
      %c1120 = arith.constant 1120 : index
      %66 = vector.load %arg4[%c0_68, %c1120] : memref<40x1296xf32, #tpu.memory_space<vmem>>, vector<16x32xf32>
      tpu.vector_store %arg4[%c0_68, %c1120], %65 {strides = array<i32>} : memref<40x1296xf32, #tpu.memory_space<vmem>>, vector<16x32xf32>,
      %c0_69 = arith.constant 0 : index
      %c992 = arith.constant 992 : index
      %67 = vector.load %arg1[%c0_69, %c992] : memref<16x1024xf32, #tpu.memory_space<vmem>>, vector<16x32xf32>
      %c0_70 = arith.constant 0 : index
      %c1156 = arith.constant 1156 : index
      %68 = vector.load %arg4[%c0_70, %c1156] : memref<40x1296xf32, #tpu.memory_space<vmem>>, vector<16x32xf32>
      tpu.vector_store %arg4[%c0_70, %c1156], %67 {strides = array<i32>} : memref<40x1296xf32, #tpu.memory_space<vmem>>, vector<16x32xf32>,
      %c0_71 = arith.constant 0 : index
      %c0_72 = arith.constant 0 : index
      %69 = vector.load %arg4[%c0_71, %c0_72] : memref<40x1296xf32, #tpu.memory_space<vmem>>, vector<16x1296xf32>
      %c0_73 = arith.constant 0 : index
      %c0_74 = arith.constant 0 : index
      %70 = vector.load %arg2[%c0_73, %c0_74] : memref<1x1296xf32, #tpu.memory_space<vmem>>, vector<1x1296xf32>
      %cst = arith.constant dense<0xFF800000> : vector<16xf32>
      %71 = vector.multi_reduction <maximumf>, %69, %cst [1] : vector<16x1296xf32> to vector<16xf32>
      %72 = vector.shape_cast %71 : vector<16xf32> to vector<16x1xf32>
      %73 = tpu.iota {dimensions = array<i32: 1>} : vector<16x1296xi32>
      %74 = vector.broadcast %72 : vector<16x1xf32> to vector<16x1296xf32>
      %75 = arith.cmpf oeq, %69, %74 : vector<16x1296xf32>
      %c1296_i32 = arith.constant 1296 : i32
      %76 = vector.broadcast %c1296_i32 : i32 to vector<16x1296xi32>
      %77 = arith.select %75, %73, %76 : vector<16x1296xi1>, vector<16x1296xi32>
      %cst_75 = arith.constant dense<2147483647> : vector<16xi32>
      %78 = vector.multi_reduction <minsi>, %77, %cst_75 [1] : vector<16x1296xi32> to vector<16xi32>
      %79 = vector.shape_cast %78 : vector<16xi32> to vector<16x1xi32>
      %80 = vector.broadcast %79 : vector<16x1xi32> to vector<16x1296xi32>
      %81 = arith.cmpi eq, %73, %80 : vector<16x1296xi32>
      %cst_76 = arith.constant 0.000000e+00 : f32
      %82 = vector.shape_cast %70 : vector<1x1296xf32> to vector<1x1296xf32>
      %83 = vector.broadcast %82 : vector<1x1296xf32> to vector<16x1296xf32>
      %84 = vector.broadcast %cst_76 : f32 to vector<16x1296xf32>
      %85 = arith.select %81, %83, %84 : vector<16x1296xi1>, vector<16x1296xf32>
      %cst_77 = arith.constant dense<0.000000e+00> : vector<16xf32>
      %86 = vector.multi_reduction <add>, %85, %cst_77 [1] : vector<16x1296xf32> to vector<16xf32>
      %87 = vector.shape_cast %86 : vector<16xf32> to vector<16x1xf32>
      %88 = vector.broadcast %87 : vector<16x1xf32> to vector<16x1296xf32>
      %89 = arith.addf %69, %88 : vector<16x1296xf32>
      %c0_78 = arith.constant 0 : index
      %c0_79 = arith.constant 0 : index
      %90 = vector.load %arg4[%c0_78, %c0_79] : memref<40x1296xf32, #tpu.memory_space<vmem>>, vector<16x1296xf32>
      tpu.vector_store %arg4[%c0_78, %c0_79], %89 {strides = array<i32>} : memref<40x1296xf32, #tpu.memory_space<vmem>>, vector<16x1296xf32>,
      %c18 = arith.constant 18 : index
      %c0_80 = arith.constant 0 : index
      %91 = vector.load %arg4[%c18, %c0_80] : memref<40x1296xf32, #tpu.memory_space<vmem>>, vector<16x1296xf32>
      tpu.vector_store %arg4[%c18, %c0_80], %89 {strides = array<i32>} : memref<40x1296xf32, #tpu.memory_space<vmem>>, vector<16x1296xf32>,
    } else {
    }
    return
  }
  func.func @transform_0(%arg0: i32) -> (i32, i32) {
    %c0_i32 = arith.constant 0 : i32
    %c0_i32_0 = arith.constant 0 : i32
    %c0_i32_1 = arith.constant 0 : i32
    return %c0_i32, %c0_i32_0 : i32, i32
  }
  func.func @transform_1(%arg0: i32) -> (i32, i32) {
    %c0_i32 = arith.constant 0 : i32
    %c0_i32_0 = arith.constant 0 : i32
    %c0_i32_1 = arith.constant 0 : i32
    return %c0_i32, %c0_i32_0 : i32, i32
  }
  func.func @transform_2(%arg0: i32) -> (i32, i32) {
    %c0_i32 = arith.constant 0 : i32
    %c0_i32_0 = arith.constant 0 : i32
    return %arg0, %c0_i32 : i32, i32
  }
  func.func @transform_3(%arg0: i32) -> (i32, i32) {
    %c0_i32 = arith.constant 0 : i32
    %c0_i32_0 = arith.constant 0 : i32
    return %arg0, %c0_i32 : i32, i32
  }
}

</mosaic_0001>

<llo_original>
// kernel: forward.1
$region0: #{forward.1}
  #allocation0 [shape = 'u32[]', space=smem, size = 0x4, offset = 0x4, fixed_abs, tag = 'smem constant byte address 0x4 - core index']
  #allocation1 [shape = 'u32[72,128]{1,0:T(1,128)}', space=vmem, size = 0x9000, scoped, tag = 'internal scratch']
  %s0 = inlined_call_operand.vmem [shape: f32[16,1024], index: 0, kind: input, shape index: {}]
  %s1 = inlined_call_operand.vmem [shape: f32[1,1296], index: 1, kind: input, shape index: {}]
  %s2 = inlined_call_operand.hbm [shape: f32[117,1296], index: 2, kind: input, shape index: {}]
  %s3 = inlined_call_operand.vmem [shape: f32[117,1296], index: 3, kind: output, shape index: {}]
  %s4 = sld [smem:[#allocation0]]
  $region53: #{forward.1} parent=0
    _
  %s6 = ssub.s32 1, %s4
  %s7 = scalar_select 0, %s6, %s4
  $region1: #{forward.1} parent=0
    #allocation2 [shape = 'u8[450560]{0}', space=vmem, size = 0x6e000, scoped, tag = 'input window, operand 2']
    #allocation3 [shape = 's32[2]{0}', space=sflag, size = 0x8, scoped, tag = 'scoped memory for forward.1']
    %8 = vsyncpa [#allocation3], 0
    %s9 = scalar_lea.sflag [#allocation3], 1
    %10 = vsyncpa %s9, 0
    loop: start=0, step=1, limit=5
    $region2: #{forward.1} parent=1 // loop_pre_header
      _
    $region3: #{forward.1} parent=1 // loop_header
      %s12 = sphi 0, %s16
      %p13 = scmp.ge.s32.totalorder %s12, 5
      %s20 = sphi 0, %s20
      %s22 = sphi 0, %s20
      %s23 = sphi 0, %s22
      %s37 = sphi 0, %s23
      %s41 = sphi 0, %s41
      %s43 = sphi 0, %s41
      %s44 = sphi 0, %s43
      %s58 = sphi 0, %s44
      %s64 = sphi 0, %s66
      %s67 = sphi 0, %s64
      %s68 = sphi 0, %s67
      %s84 = sphi 0, %s68
      %s90 = sphi 0, %s92
      %s93 = sphi 0, %s90
      %s94 = sphi 0, %s93
      %s110 = sphi 0, %s94
    $region4: #{forward.1} parent=1 // loop_header_branch
      %15 = sbr.rel (%p13) target = $region8
    $region5: #{forward.1} parent=1 // loop_body
      %s17 = ssub.s32 %s12, 1
      %s18 = ssub.s32 %s12, 2
      %s19 = sadd.s32 %s12, 1
      %s21 = sadd.s32 %s20, 1
      %p24 = scmp.eq.s32.totalorder %s12, 2
      %p25 = scmp.ne.s32.totalorder %s20, %s22
      %p26 = scmp.eq.s32.totalorder %s12, 0
      %p27 = por %p25, %p26
      %p28 = scmp.ne.s32.totalorder %s20, %s22
      %p29 = scmp.eq.s32.totalorder %s17, 2
      %p30 = por %p28, %p29
      %p31 = scmp.ne.s32.totalorder %s22, %s23
      %p32 = scmp.eq.s32.totalorder %s17, 0
      %p33 = por %p31, %p32
      %p34 = scmp.ne.s32.totalorder %s22, %s23
      %p35 = scmp.eq.s32.totalorder %s18, 2
      %p36 = por %p34, %p35
      %p38 = scmp.ne.s32.totalorder %s23, %s37
      %p39 = scmp.eq.s32.totalorder %s18, 0
      %p40 = por %p38, %p39
      %s42 = sadd.s32 %s41, 1
      %p45 = scmp.eq.s32.totalorder %s12, 2
      %p46 = scmp.ne.s32.totalorder %s41, %s43
      %p47 = scmp.eq.s32.totalorder %s12, 0
      %p48 = por %p46, %p47
      %p49 = scmp.ne.s32.totalorder %s41, %s43
      %p50 = scmp.eq.s32.totalorder %s17, 2
      %p51 = por %p49, %p50
      %p52 = scmp.ne.s32.totalorder %s43, %s44
      %p53 = scmp.eq.s32.totalorder %s17, 0
      %p54 = por %p52, %p53
      %p55 = scmp.ne.s32.totalorder %s43, %s44
      %p56 = scmp.eq.s32.totalorder %s18, 2
      %p57 = por %p55, %p56
      %p59 = scmp.ne.s32.totalorder %s44, %s58
      %p60 = scmp.eq.s32.totalorder %s18, 0
      %p61 = por %p59, %p60
      %s62 = ssub.s32 %s12, %s19
      %p63 = scmp.eq.s32.totalorder %s62, 0
      %s65 = sadd.s32 %s64, 1
      %s66 = scalar_select %p63, %s64, %s65
      %p69 = pneg %p63
      %p70 = scmp.eq.s32.totalorder %s12, 2
      %p71 = por %p69, %p70
      %p72 = scmp.ne.s32.totalorder %s64, %s67
      %p73 = scmp.eq.s32.totalorder %s12, 0
      %p74 = por %p72, %p73
      %p75 = scmp.ne.s32.totalorder %s64, %s67
      %p76 = scmp.eq.s32.totalorder %s17, 2
      %p77 = por %p75, %p76
      %p78 = scmp.ne.s32.totalorder %s67, %s68
      %p79 = scmp.eq.s32.totalorder %s17, 0
      %p80 = por %p78, %p79
      %p81 = scmp.ne.s32.totalorder %s67, %s68
      %p82 = scmp.eq.s32.totalorder %s18, 2
      %p83 = por %p81, %p82
      %p85 = scmp.ne.s32.totalorder %s68, %s84
      %p86 = scmp.eq.s32.totalorder %s18, 0
      %p87 = por %p85, %p86
      %s88 = ssub.s32 %s12, %s19
      %p89 = scmp.eq.s32.totalorder %s88, 0
      %s91 = sadd.s32 %s90, 1
      %s92 = scalar_select %p89, %s90, %s91
      %p95 = pneg %p89
      %p96 = scmp.eq.s32.totalorder %s12, 2
      %p97 = por %p95, %p96
      %p98 = scmp.ne.s32.totalorder %s90, %s93
      %p99 = scmp.eq.s32.totalorder %s12, 0
      %p100 = por %p98, %p99
      %p101 = scmp.ne.s32.totalorder %s90, %s93
      %p102 = scmp.eq.s32.totalorder %s17, 2
      %p103 = por %p101, %p102
      %p104 = scmp.ne.s32.totalorder %s93, %s94
      %p105 = scmp.eq.s32.totalorder %s17, 0
      %p106 = por %p104, %p105
      %p107 = scmp.ne.s32.totalorder %s93, %s94
      %p108 = scmp.eq.s32.totalorder %s18, 2
      %p109 = por %p107, %p108
      %p111 = scmp.ne.s32.totalorder %s94, %s110
      %p112 = scmp.eq.s32.totalorder %s18, 0
      %p113 = por %p111, %p112
      %p114 = scmp.le.s32.totalorder 1, %s12
      %p115 = scmp.lt.s32.totalorder %s12, 4
      %p116 = pnand %p114, %p115
      %p117 = pneg %p116
      // Predicated region
      $region9: #{forward.1} parent=5 // pred_check
        _
      $region10: #{forward.1} parent=5 // pred_check_branch
        %119 = sbr.rel (%p116) target = $region12
      $region11: #{forward.1} parent=5 // pred_region
        %s120 = ssub.s32 %s12, 1
        // Predicated region
        $region13: #{forward.1} parent=11 // pred_check
          %p121 = pneg %p33
        $region14: #{forward.1} parent=11 // pred_check_branch
          %123 = sbr.rel (%p121) target = $region16
        $region15: #{forward.1} parent=11 // pred_region
          _
        $region16: #{forward.1} parent=11 // pred_fallthru
          _
        // Predicated region
        $region17: #{forward.1} parent=11 // pred_check
          %p124 = pneg %p54
        $region18: #{forward.1} parent=11 // pred_check_branch
          %126 = sbr.rel (%p124) target = $region20
        $region19: #{forward.1} parent=11 // pred_region
          _
        $region20: #{forward.1} parent=11 // pred_fallthru
          _
      $region12: #{forward.1} parent=5 // pred_fallthru
        _
      %p127 = scmp.lt.s32.totalorder %s12, 3
      // Predicated region
      $region21: #{forward.1} parent=5 // pred_check
        %p128 = pneg %p127
      $region22: #{forward.1} parent=5 // pred_check_branch
        %130 = sbr.rel (%p128) target = $region24
      $region23: #{forward.1} parent=5 // pred_region
        // Predicated region
        $region25: #{forward.1} parent=23 // pred_check
          %p131 = pneg %p74
        $region26: #{forward.1} parent=23 // pred_check_branch
          %133 = sbr.rel (%p131) target = $region28
        $region27: #{forward.1} parent=23 // pred_region
          %s134 = sand.u32 %s64, 1
          %s135 = scalar_lea.sflag [#allocation3], %s134
          %s136 = sand.u32 %s64, 1
          %s137 = smul.addr %s136, 440
          %s138 = scalar_lea.vmem [#allocation2], %s137
          %s139 = smul.u32 5, %s12
          %141 = vsyncadd %s135, 0
          %s142 = smul.addr %s139, 11
          %s143 = smul.addr %s142, 8
          %s144 = scalar_lea.hbm %s2, %s143
          %s145 = sshll.u32 %s144, 4
          %s146 = int_to_ptr.hbm [resolvable:$true] %s145
          %s147 = sshll.u32 %s138, 4
          %s148 = int_to_ptr.vmem [resolvable:$true] %s147
          %153 = dma.hbm_to_vmem [thread:$0]  %s146, 7040, %s148, %s135, 1408, 1408, 88
        $region28: #{forward.1} parent=23 // pred_fallthru
          _
      $region24: #{forward.1} parent=5 // pred_fallthru
        _
      %p154 = scmp.le.s32.totalorder 1, %s12
      %p155 = scmp.lt.s32.totalorder %s12, 4
      %p156 = pnand %p154, %p155
      %p157 = pneg %p156
      // Predicated region
      $region29: #{forward.1} parent=5 // pred_check
        _
      $region30: #{forward.1} parent=5 // pred_check_branch
        %159 = sbr.rel (%p156) target = $region32
      $region31: #{forward.1} parent=5 // pred_region
        %s160 = ssub.s32 %s12, 1
        %s161 = sand.u32 %s67, 1
        %s162 = scalar_lea.sflag [#allocation3], %s161
        %s163 = sand.u32 %s67, 1
        %s164 = smul.addr %s163, 440
        %s165 = scalar_lea.vmem [#allocation2], %s164
        // Predicated region
        $region33: #{forward.1} parent=31 // pred_check
          %p166 = pneg %p80
        $region34: #{forward.1} parent=31 // pred_check_branch
          %168 = sbr.rel (%p166) target = $region36
        $region35: #{forward.1} parent=31 // pred_region
          %170 = dma.done %s162, 7040
        $region36: #{forward.1} parent=31 // pred_fallthru
          _
        %p171 = pneg %p33
        %p172 = pneg %p30
        %p173 = pneg %p54
        %p174 = pneg %p51
        %s175 = sand.u32 %s67, 1
        %s176 = scalar_lea.sflag [#allocation3], %s175
        %s177 = sand.u32 %s67, 1
        %s178 = smul.addr %s177, 440
        %s179 = scalar_lea.vmem [#allocation2], %s178
        %p180 = pneg %p80
        %p181 = pneg %p77
        %p182 = pneg %p106
        %p183 = pneg %p103
        %s184 = smul.u32 5, %s17
        %p185 = scmp.lt.s32.totalorder %s184, 14
        %s186 = scalar_select %p185, %s184, 14
        %s187 = smul.addr %s186, 11
        %s188 = smul.addr %s187, 8
        %s189 = scalar_lea.vmem %s3, %s188
        %s190 = smul.u32 5, %s17
        %s191 = smul.u32 5, %s17
        %p192 = scmp.lt.s32.totalorder %s191, 14
        %s193 = scalar_select %p192, %s191, 14
        %s194 = smul.addr %s193, 11
        %s195 = smul.addr %s194, 8
        %s196 = scalar_lea.vmem %s3, %s195
        %s197 = smul.u32 5, %s17
        %v198 = vld [vmem:[%s165] sm:$0xff]
        %v199 = vld [vmem:[%s165 + $0x8] sm:$0xff]
        %v200 = vld [vmem:[%s165 + $0x10] sm:$0xff]
        %v201 = vld [vmem:[%s165 + $0x18] sm:$0xff]
        %v202 = vld [vmem:[%s165 + $0x20] sm:$0xff]
        %v203 = vld [vmem:[%s165 + $0x28] sm:$0xff]
        %v204 = vld [vmem:[%s165 + $0x30] sm:$0xff]
        %v205 = vld [vmem:[%s165 + $0x38] sm:$0xff]
        %v206 = vld [vmem:[%s165 + $0x40] sm:$0xff]
        %v207 = vld [vmem:[%s165 + $0x48] sm:$0xff]
        %v208 = vld [vmem:[%s165 + $0x50] sm:$0xff]
        %v209 = vld [vmem:[%s165 + $0x58] sm:$0xff]
        %v210 = vld [vmem:[%s165 + $0x60] sm:$0xff]
        %v211 = vld [vmem:[%s165 + $0x68] sm:$0xff]
        %v212 = vld [vmem:[%s165 + $0x70] sm:$0xff]
        %v213 = vld [vmem:[%s165 + $0x78] sm:$0xff]
        %v214 = vld [vmem:[%s165 + $0x80] sm:$0xff]
        %v215 = vld [vmem:[%s165 + $0x88] sm:$0xff]
        %v216 = vld [vmem:[%s165 + $0x90] sm:$0xff]
        %v217 = vld [vmem:[%s165 + $0x98] sm:$0xff]
        %v218 = vld [vmem:[%s165 + $0xa0] sm:$0xff]
        %v219 = vld [vmem:[%s165 + $0xa8] sm:$0xff]
        %v220 = vld [vmem:[%s165 + $0xb0] sm:$0xff]
        %v221 = vld [vmem:[%s165 + $0xb8] sm:$0xff]
        %v222 = vld [vmem:[%s165 + $0xc0] sm:$0xff]
        %v223 = vld [vmem:[%s165 + $0xc8] sm:$0xff]
        %v224 = vld [vmem:[%s165 + $0xd0] sm:$0xff]
        %v225 = vld [vmem:[%s165 + $0xd8] sm:$0xff]
        %v226 = vld [vmem:[%s165 + $0xe0] sm:$0xff]
        %v227 = vld [vmem:[%s165 + $0xe8] sm:$0xff]
        %v228 = vld [vmem:[%s165 + $0xf0] sm:$0xff]
        %v229 = vld [vmem:[%s165 + $0xf8] sm:$0xff]
        %v230 = vld [vmem:[%s165 + $0x100] sm:$0xff]
        %v231 = vld [vmem:[%s165 + $0x108] sm:$0xff]
        %v232 = vld [vmem:[%s165 + $0x110] sm:$0xff]
        %v233 = vld [vmem:[%s165 + $0x118] sm:$0xff]
        %v234 = vld [vmem:[%s165 + $0x120] sm:$0xff]
        %v235 = vld [vmem:[%s165 + $0x128] sm:$0xff]
        %v236 = vld [vmem:[%s165 + $0x130] sm:$0xff]
        %v237 = vld [vmem:[%s165 + $0x138] sm:$0xff]
        %v238 = vld [vmem:[%s165 + $0x140] sm:$0xff]
        %v239 = vld [vmem:[%s165 + $0x148] sm:$0xff]
        %v240 = vld [vmem:[%s165 + $0x150] sm:$0xff]
        %v241 = vld [vmem:[%s165 + $0x158] sm:$0xff]
        %v242 = vld [vmem:[%s165 + $0x160] sm:$0xff]
        %v243 = vld [vmem:[%s165 + $0x168] sm:$0xff]
        %v244 = vld [vmem:[%s165 + $0x170] sm:$0xff]
        %v245 = vld [vmem:[%s165 + $0x178] sm:$0xff]
        %v246 = vld [vmem:[%s165 + $0x180] sm:$0xff]
        %v247 = vld [vmem:[%s165 + $0x188] sm:$0xff]
        %v248 = vld [vmem:[%s165 + $0x190] sm:$0xff]
        %v249 = vld [vmem:[%s165 + $0x198] sm:$0xff]
        %v250 = vld [vmem:[%s165 + $0x1a0] sm:$0xff]
        %v251 = vld [vmem:[%s165 + $0x1a8] sm:$0xff]
        %v252 = vld [vmem:[%s165 + $0x1b0] sm:$0xff]
        %253 = vst [vmem:[%s196] sm:$0xff] %v198
        %254 = vst [vmem:[%s196 + $0x8] sm:$0xff] %v199
        %255 = vst [vmem:[%s196 + $0x10] sm:$0xff] %v200
        %256 = vst [vmem:[%s196 + $0x18] sm:$0xff] %v201
        %257 = vst [vmem:[%s196 + $0x20] sm:$0xff] %v202
        %258 = vst [vmem:[%s196 + $0x28] sm:$0xff] %v203
        %259 = vst [vmem:[%s196 + $0x30] sm:$0xff] %v204
        %260 = vst [vmem:[%s196 + $0x38] sm:$0xff] %v205
        %261 = vst [vmem:[%s196 + $0x40] sm:$0xff] %v206
        %262 = vst [vmem:[%s196 + $0x48] sm:$0xff] %v207
        %vm263 = vcmask 130048
        %264 = vst.msk [vmem:[%s196 + $0x50] sm:$0xff] %vm263, %v208
        %265 = vst [vmem:[%s196 + $0x58] sm:$0xff] %v209
        %266 = vst [vmem:[%s196 + $0x60] sm:$0xff] %v210
        %267 = vst [vmem:[%s196 + $0x68] sm:$0xff] %v211
        %268 = vst [vmem:[%s196 + $0x70] sm:$0xff] %v212
        %269 = vst [vmem:[%s196 + $0x78] sm:$0xff] %v213
        %270 = vst [vmem:[%s196 + $0x80] sm:$0xff] %v214
        %271 = vst [vmem:[%s196 + $0x88] sm:$0xff] %v215
        %272 = vst [vmem:[%s196 + $0x90] sm:$0xff] %v216
        %273 = vst [vmem:[%s196 + $0x98] sm:$0xff] %v217
        %274 = vst [vmem:[%s196 + $0xa0] sm:$0xff] %v218
        %275 = vst.msk [vmem:[%s196 + $0xa8] sm:$0xff] %vm263, %v219
        %276 = vst [vmem:[%s196 + $0xb0] sm:$0xff] %v220
        %277 = vst [vmem:[%s196 + $0xb8] sm:$0xff] %v221
        %278 = vst [vmem:[%s196 + $0xc0] sm:$0xff] %v222
        %279 = vst [vmem:[%s196 + $0xc8] sm:$0xff] %v223
        %280 = vst [vmem:[%s196 + $0xd0] sm:$0xff] %v224
        %281 = vst [vmem:[%s196 + $0xd8] sm:$0xff] %v225
        %282 = vst [vmem:[%s196 + $0xe0] sm:$0xff] %v226
        %283 = vst [vmem:[%s196 + $0xe8] sm:$0xff] %v227
        %284 = vst [vmem:[%s196 + $0xf0] sm:$0xff] %v228
        %285 = vst [vmem:[%s196 + $0xf8] sm:$0xff] %v229
        %286 = vst.msk [vmem:[%s196 + $0x100] sm:$0xff] %vm263, %v230
        %287 = vst [vmem:[%s196 + $0x108] sm:$0xff] %v231
        %288 = vst [vmem:[%s196 + $0x110] sm:$0xff] %v232
        %289 = vst [vmem:[%s196 + $0x118] sm:$0xff] %v233
        %290 = vst [vmem:[%s196 + $0x120] sm:$0xff] %v234
        %291 = vst [vmem:[%s196 + $0x128] sm:$0xff] %v235
        %292 = vst [vmem:[%s196 + $0x130] sm:$0xff] %v236
        %293 = vst [vmem:[%s196 + $0x138] sm:$0xff] %v237
        %294 = vst [vmem:[%s196 + $0x140] sm:$0xff] %v238
        %295 = vst [vmem:[%s196 + $0x148] sm:$0xff] %v239
        %296 = vst [vmem:[%s196 + $0x150] sm:$0xff] %v240
        %297 = vst.msk [vmem:[%s196 + $0x158] sm:$0xff] %vm263, %v241
        %298 = vst [vmem:[%s196 + $0x160] sm:$0xff] %v242
        %299 = vst [vmem:[%s196 + $0x168] sm:$0xff] %v243
        %300 = vst [vmem:[%s196 + $0x170] sm:$0xff] %v244
        %301 = vst [vmem:[%s196 + $0x178] sm:$0xff] %v245
        %302 = vst [vmem:[%s196 + $0x180] sm:$0xff] %v246
        %303 = vst [vmem:[%s196 + $0x188] sm:$0xff] %v247
        %304 = vst [vmem:[%s196 + $0x190] sm:$0xff] %v248
        %305 = vst [vmem:[%s196 + $0x198] sm:$0xff] %v249
        %306 = vst [vmem:[%s196 + $0x1a0] sm:$0xff] %v250
        %307 = vst [vmem:[%s196 + $0x1a8] sm:$0xff] %v251
        %308 = vst.msk [vmem:[%s196 + $0x1b0] sm:$0xff] %vm263, %v252
        %p309 = scmp.eq.s32.totalorder %s17, 1
        // Predicated region
        $region37: #{forward.1} parent=31 // pred_check
          %p310 = pneg %p309
        $region38: #{forward.1} parent=31 // pred_check_branch
          %312 = sbr.rel (%p310) target = $region40
        $region39: #{forward.1} parent=31 // pred_region
          %v313 = vld [vmem:[%s0] sm:$0xff]
          %v314 = vld [vmem:[%s0 + $0x40] sm:$0xff]
          %317 = vrot.lane.b32.xlu0 %v313, 40
          %v318 = vpop.permute.xlu0 %317
          %319 = vrot.lane.b32.xlu0 %v314, 40
          %v320 = vpop.permute.xlu0 %319
          %vm323 = vcmask 589120
          %324 = vst.msk [vmem:[%s196] sm:$0xff] %vm323, %v318
          %325 = vst.msk [vmem:[%s196 + $0x58] sm:$0xff] %vm323, %v320
          %v326 = vld [vmem:[%s0] sm:$0xff]
          %v327 = vld [vmem:[%s0 + $0x40] sm:$0xff]
          %330 = vrot.lane.b32.xlu0 %v326, 44
          %v331 = vpop.permute.xlu0 %330
          %332 = vrot.lane.b32.xlu0 %v327, 44
          %v333 = vpop.permute.xlu0 %332
          %vm336 = vcmask 884320
          %337 = vst.msk [vmem:[%s196] sm:$0xff] %vm336, %v331
          %338 = vst.msk [vmem:[%s196 + $0x58] sm:$0xff] %vm336, %v333
          %v339 = vld [vmem:[%s0] sm:$0xff]
          %v340 = vld [vmem:[%s0 + $0x40] sm:$0xff]
          %343 = vrot.lane.b32.xlu0 %v339, 48
          %v344 = vpop.permute.xlu0 %343
          %345 = vrot.lane.b32.xlu0 %v340, 48
          %v346 = vpop.permute.xlu0 %345
          %vm349 = vcmask 1048448
          %350 = vst.msk [vmem:[%s196] sm:$0xff] %vm349, %v344
          %351 = vst.msk [vmem:[%s196 + $0x8] sm:$0xff] %vm263, %v344
          %352 = vst.msk [vmem:[%s196 + $0x58] sm:$0xff] %vm349, %v346
          %353 = vst.msk [vmem:[%s196 + $0x60] sm:$0xff] %vm263, %v346
          %v354 = vld [vmem:[%s0] sm:$0xff]
          %v355 = vld [vmem:[%s0 + $0x40] sm:$0xff]
          %358 = vrot.lane.b32.xlu0 %v354, 52
          %v359 = vpop.permute.xlu0 %358
          %360 = vrot.lane.b32.xlu0 %v355, 52
          %v361 = vpop.permute.xlu0 %360
          %vm364 = vcmask 425120
          %365 = vst.msk [vmem:[%s196 + $0x8] sm:$0xff] %vm364, %v359
          %366 = vst.msk [vmem:[%s196 + $0x60] sm:$0xff] %vm364, %v361
          %v367 = vld [vmem:[%s0 + $0x8] sm:$0xff]
          %v368 = vld [vmem:[%s0 + $0x48] sm:$0xff]
          %371 = vrot.lane.b32.xlu0 %v367, 56
          %v372 = vpop.permute.xlu0 %371
          %373 = vrot.lane.b32.xlu0 %v368, 56
          %v374 = vpop.permute.xlu0 %373
          %vm377 = vcmask 720320
          %378 = vst.msk [vmem:[%s196 + $0x8] sm:$0xff] %vm377, %v372
          %379 = vst.msk [vmem:[%s196 + $0x60] sm:$0xff] %vm377, %v374
          %v380 = vld [vmem:[%s0 + $0x8] sm:$0xff]
          %v381 = vld [vmem:[%s0 + $0x48] sm:$0xff]
          %384 = vrot.lane.b32.xlu0 %v380, 60
          %v385 = vpop.permute.xlu0 %384
          %386 = vrot.lane.b32.xlu0 %v381, 60
          %v387 = vpop.permute.xlu0 %386
          %vm390 = vcmask 1015520
          %391 = vst.msk [vmem:[%s196 + $0x8] sm:$0xff] %vm390, %v385
          %392 = vst.msk [vmem:[%s196 + $0x60] sm:$0xff] %vm390, %v387
          %v393 = vld [vmem:[%s0 + $0x8] sm:$0xff]
          %v394 = vld [vmem:[%s0 + $0x48] sm:$0xff]
          %397 = vrot.lane.b32.xlu0 %v393, 64
          %v398 = vpop.permute.xlu0 %397
          %399 = vrot.lane.b32.xlu0 %v394, 64
          %v400 = vpop.permute.xlu0 %399
          %vm403 = vcmask 261120
          %404 = vst.msk [vmem:[%s196 + $0x10] sm:$0xff] %vm403, %v398
          %405 = vst.msk [vmem:[%s196 + $0x68] sm:$0xff] %vm403, %v400
          %v406 = vld [vmem:[%s0 + $0x8] sm:$0xff]
          %v407 = vld [vmem:[%s0 + $0x48] sm:$0xff]
          %410 = vrot.lane.b32.xlu0 %v406, 68
          %v411 = vpop.permute.xlu0 %410
          %412 = vrot.lane.b32.xlu0 %v407, 68
          %v413 = vpop.permute.xlu0 %412
          %vm416 = vcmask 556320
          %417 = vst.msk [vmem:[%s196 + $0x10] sm:$0xff] %vm416, %v411
          %418 = vst.msk [vmem:[%s196 + $0x68] sm:$0xff] %vm416, %v413
          %v419 = vld [vmem:[%s0 + $0x10] sm:$0xff]
          %v420 = vld [vmem:[%s0 + $0x50] sm:$0xff]
          %423 = vrot.lane.b32.xlu0 %v419, 72
          %v424 = vpop.permute.xlu0 %423
          %425 = vrot.lane.b32.xlu0 %v420, 72
          %v426 = vpop.permute.xlu0 %425
          %vm429 = vcmask 851520
          %430 = vst.msk [vmem:[%s196 + $0x10] sm:$0xff] %vm429, %v424
          %431 = vst.msk [vmem:[%s196 + $0x68] sm:$0xff] %vm429, %v426
          %v432 = vld [vmem:[%s0 + $0x10] sm:$0xff]
          %v433 = vld [vmem:[%s0 + $0x50] sm:$0xff]
          %436 = vrot.lane.b32.xlu0 %v432, 76
          %v437 = vpop.permute.xlu0 %436
          %438 = vrot.lane.b32.xlu0 %v433, 76
          %v439 = vpop.permute.xlu0 %438
          %vm442 = vcmask 1048416
          %443 = vst.msk [vmem:[%s196 + $0x10] sm:$0xff] %vm442, %v437
          %vm444 = vcmask 97280
          %445 = vst.msk [vmem:[%s196 + $0x18] sm:$0xff] %vm444, %v437
          %446 = vst.msk [vmem:[%s196 + $0x68] sm:$0xff] %vm442, %v439
          %447 = vst.msk [vmem:[%s196 + $0x70] sm:$0xff] %vm444, %v439
          %v448 = vld [vmem:[%s0 + $0x10] sm:$0xff]
          %v449 = vld [vmem:[%s0 + $0x50] sm:$0xff]
          %452 = vrot.lane.b32.xlu0 %v448, 80
          %v453 = vpop.permute.xlu0 %452
          %454 = vrot.lane.b32.xlu0 %v449, 80
          %v455 = vpop.permute.xlu0 %454
          %vm458 = vcmask 392320
          %459 = vst.msk [vmem:[%s196 + $0x18] sm:$0xff] %vm458, %v453
          %460 = vst.msk [vmem:[%s196 + $0x70] sm:$0xff] %vm458, %v455
          %v461 = vld [vmem:[%s0 + $0x10] sm:$0xff]
          %v462 = vld [vmem:[%s0 + $0x50] sm:$0xff]
          %465 = vrot.lane.b32.xlu0 %v461, 84
          %v466 = vpop.permute.xlu0 %465
          %467 = vrot.lane.b32.xlu0 %v462, 84
          %v468 = vpop.permute.xlu0 %467
          %vm471 = vcmask 687520
          %472 = vst.msk [vmem:[%s196 + $0x18] sm:$0xff] %vm471, %v466
          %473 = vst.msk [vmem:[%s196 + $0x70] sm:$0xff] %vm471, %v468
          %v474 = vld [vmem:[%s0 + $0x18] sm:$0xff]
          %v475 = vld [vmem:[%s0 + $0x58] sm:$0xff]
          %478 = vrot.lane.b32.xlu0 %v474, 88
          %v479 = vpop.permute.xlu0 %478
          %480 = vrot.lane.b32.xlu0 %v475, 88
          %v481 = vpop.permute.xlu0 %480
          %vm484 = vcmask 982720
          %485 = vst.msk [vmem:[%s196 + $0x18] sm:$0xff] %vm484, %v479
          %486 = vst.msk [vmem:[%s196 + $0x70] sm:$0xff] %vm484, %v481
          %v487 = vld [vmem:[%s0 + $0x18] sm:$0xff]
          %v488 = vld [vmem:[%s0 + $0x58] sm:$0xff]
          %491 = vrot.lane.b32.xlu0 %v487, 92
          %v492 = vpop.permute.xlu0 %491
          %493 = vrot.lane.b32.xlu0 %v488, 92
          %v494 = vpop.permute.xlu0 %493
          %vm497 = vcmask 1048544
          %498 = vst.msk [vmem:[%s196 + $0x18] sm:$0xff] %vm497, %v492
          %vm499 = vcmask 228352
          %500 = vst.msk [vmem:[%s196 + $0x20] sm:$0xff] %vm499, %v492
          %501 = vst.msk [vmem:[%s196 + $0x70] sm:$0xff] %vm497, %v494
          %502 = vst.msk [vmem:[%s196 + $0x78] sm:$0xff] %vm499, %v494
          %v503 = vld [vmem:[%s0 + $0x18] sm:$0xff]
          %v504 = vld [vmem:[%s0 + $0x58] sm:$0xff]
          %507 = vrot.lane.b32.xlu0 %v503, 96
          %v508 = vpop.permute.xlu0 %507
          %509 = vrot.lane.b32.xlu0 %v504, 96
          %v510 = vpop.permute.xlu0 %509
          %vm513 = vcmask 523520
          %514 = vst.msk [vmem:[%s196 + $0x20] sm:$0xff] %vm513, %v508
          %515 = vst.msk [vmem:[%s196 + $0x78] sm:$0xff] %vm513, %v510
          %v516 = vld [vmem:[%s0 + $0x18] sm:$0xff]
          %v517 = vld [vmem:[%s0 + $0x58] sm:$0xff]
          %520 = vrot.lane.b32.xlu0 %v516, 100
          %v521 = vpop.permute.xlu0 %520
          %522 = vrot.lane.b32.xlu0 %v517, 100
          %v523 = vpop.permute.xlu0 %522
          %vm526 = vcmask 818720
          %527 = vst.msk [vmem:[%s196 + $0x20] sm:$0xff] %vm526, %v521
          %528 = vst.msk [vmem:[%s196 + $0x78] sm:$0xff] %vm526, %v523
          %v529 = vld [vmem:[%s0 + $0x20] sm:$0xff]
          %v530 = vld [vmem:[%s0 + $0x60] sm:$0xff]
          %533 = vrot.lane.b32.xlu0 %v529, 104
          %v534 = vpop.permute.xlu0 %533
          %535 = vrot.lane.b32.xlu0 %v530, 104
          %v536 = vpop.permute.xlu0 %535
          %vm539 = vcmask 1048384
          %540 = vst.msk [vmem:[%s196 + $0x20] sm:$0xff] %vm539, %v534
          %vm541 = vcmask 64512
          %542 = vst.msk [vmem:[%s196 + $0x28] sm:$0xff] %vm541, %v534
          %543 = vst.msk [vmem:[%s196 + $0x78] sm:$0xff] %vm539, %v536
          %544 = vst.msk [vmem:[%s196 + $0x80] sm:$0xff] %vm541, %v536
          %v545 = vld [vmem:[%s0 + $0x20] sm:$0xff]
          %v546 = vld [vmem:[%s0 + $0x60] sm:$0xff]
          %549 = vrot.lane.b32.xlu0 %v545, 108
          %v550 = vpop.permute.xlu0 %549
          %551 = vrot.lane.b32.xlu0 %v546, 108
          %v552 = vpop.permute.xlu0 %551
          %vm555 = vcmask 359520
          %556 = vst.msk [vmem:[%s196 + $0x28] sm:$0xff] %vm555, %v550
          %557 = vst.msk [vmem:[%s196 + $0x80] sm:$0xff] %vm555, %v552
          %v558 = vld [vmem:[%s0 + $0x20] sm:$0xff]
          %v559 = vld [vmem:[%s0 + $0x60] sm:$0xff]
          %562 = vrot.lane.b32.xlu0 %v558, 112
          %v563 = vpop.permute.xlu0 %562
          %564 = vrot.lane.b32.xlu0 %v559, 112
          %v565 = vpop.permute.xlu0 %564
          %vm568 = vcmask 654720
          %569 = vst.msk [vmem:[%s196 + $0x28] sm:$0xff] %vm568, %v563
          %570 = vst.msk [vmem:[%s196 + $0x80] sm:$0xff] %vm568, %v565
          %v571 = vld [vmem:[%s0 + $0x20] sm:$0xff]
          %v572 = vld [vmem:[%s0 + $0x60] sm:$0xff]
          %575 = vrot.lane.b32.xlu0 %v571, 116
          %v576 = vpop.permute.xlu0 %575
          %577 = vrot.lane.b32.xlu0 %v572, 116
          %v578 = vpop.permute.xlu0 %577
          %vm581 = vcmask 949920
          %582 = vst.msk [vmem:[%s196 + $0x28] sm:$0xff] %vm581, %v576
          %583 = vst.msk [vmem:[%s196 + $0x80] sm:$0xff] %vm581, %v578
          %v584 = vld [vmem:[%s0 + $0x28] sm:$0xff]
          %v585 = vld [vmem:[%s0 + $0x68] sm:$0xff]
          %588 = vrot.lane.b32.xlu0 %v584, 120
          %v589 = vpop.permute.xlu0 %588
          %590 = vrot.lane.b32.xlu0 %v585, 120
          %v591 = vpop.permute.xlu0 %590
          %vm594 = vcmask 1048512
          %595 = vst.msk [vmem:[%s196 + $0x28] sm:$0xff] %vm594, %v589
          %vm596 = vcmask 195584
          %597 = vst.msk [vmem:[%s196 + $0x30] sm:$0xff] %vm596, %v589
          %598 = vst.msk [vmem:[%s196 + $0x80] sm:$0xff] %vm594, %v591
          %599 = vst.msk [vmem:[%s196 + $0x88] sm:$0xff] %vm596, %v591
          %v600 = vld [vmem:[%s0 + $0x28] sm:$0xff]
          %v601 = vld [vmem:[%s0 + $0x68] sm:$0xff]
          %604 = vrot.lane.b32.xlu0 %v600, 124
          %v605 = vpop.permute.xlu0 %604
          %606 = vrot.lane.b32.xlu0 %v601, 124
          %v607 = vpop.permute.xlu0 %606
          %vm610 = vcmask 490720
          %611 = vst.msk [vmem:[%s196 + $0x30] sm:$0xff] %vm610, %v605
          %612 = vst.msk [vmem:[%s196 + $0x88] sm:$0xff] %vm610, %v607
          %v613 = vld [vmem:[%s0 + $0x28] sm:$0xff]
          %v614 = vld [vmem:[%s0 + $0x68] sm:$0xff]
          %vm615 = vcmask 785920
          %616 = vst.msk [vmem:[%s196 + $0x30] sm:$0xff] %vm615, %v613
          %617 = vst.msk [vmem:[%s196 + $0x88] sm:$0xff] %vm615, %v614
          %v618 = vld [vmem:[%s0 + $0x28] sm:$0xff]
          %v619 = vld [vmem:[%s0 + $0x68] sm:$0xff]
          %622 = vrot.lane.b32.xlu0 %v618, 4
          %v623 = vpop.permute.xlu0 %622
          %624 = vrot.lane.b32.xlu0 %v619, 4
          %v625 = vpop.permute.xlu0 %624
          %vm628 = vcmask 1048352
          %629 = vst.msk [vmem:[%s196 + $0x30] sm:$0xff] %vm628, %v623
          %vm630 = vcmask 31744
          %631 = vst.msk [vmem:[%s196 + $0x38] sm:$0xff] %vm630, %v623
          %632 = vst.msk [vmem:[%s196 + $0x88] sm:$0xff] %vm628, %v625
          %633 = vst.msk [vmem:[%s196 + $0x90] sm:$0xff] %vm630, %v625
          %v634 = vld [vmem:[%s0 + $0x30] sm:$0xff]
          %v635 = vld [vmem:[%s0 + $0x70] sm:$0xff]
          %638 = vrot.lane.b32.xlu0 %v634, 8
          %v639 = vpop.permute.xlu0 %638
          %640 = vrot.lane.b32.xlu0 %v635, 8
          %v641 = vpop.permute.xlu0 %640
          %vm644 = vcmask 326720
          %645 = vst.msk [vmem:[%s196 + $0x38] sm:$0xff] %vm644, %v639
          %646 = vst.msk [vmem:[%s196 + $0x90] sm:$0xff] %vm644, %v641
          %v647 = vld [vmem:[%s0 + $0x30] sm:$0xff]
          %v648 = vld [vmem:[%s0 + $0x70] sm:$0xff]
          %651 = vrot.lane.b32.xlu0 %v647, 12
          %v652 = vpop.permute.xlu0 %651
          %653 = vrot.lane.b32.xlu0 %v648, 12
          %v654 = vpop.permute.xlu0 %653
          %vm657 = vcmask 621920
          %658 = vst.msk [vmem:[%s196 + $0x38] sm:$0xff] %vm657, %v652
          %659 = vst.msk [vmem:[%s196 + $0x90] sm:$0xff] %vm657, %v654
          %v660 = vld [vmem:[%s0 + $0x30] sm:$0xff]
          %v661 = vld [vmem:[%s0 + $0x70] sm:$0xff]
          %664 = vrot.lane.b32.xlu0 %v660, 16
          %v665 = vpop.permute.xlu0 %664
          %666 = vrot.lane.b32.xlu0 %v661, 16
          %v667 = vpop.permute.xlu0 %666
          %vm670 = vcmask 917120
          %671 = vst.msk [vmem:[%s196 + $0x38] sm:$0xff] %vm670, %v665
          %672 = vst.msk [vmem:[%s196 + $0x90] sm:$0xff] %vm670, %v667
          %v673 = vld [vmem:[%s0 + $0x30] sm:$0xff]
          %v674 = vld [vmem:[%s0 + $0x70] sm:$0xff]
          %677 = vrot.lane.b32.xlu0 %v673, 20
          %v678 = vpop.permute.xlu0 %677
          %679 = vrot.lane.b32.xlu0 %v674, 20
          %v680 = vpop.permute.xlu0 %679
          %vm683 = vcmask 1048480
          %684 = vst.msk [vmem:[%s196 + $0x38] sm:$0xff] %vm683, %v678
          %vm685 = vcmask 162816
          %686 = vst.msk [vmem:[%s196 + $0x40] sm:$0xff] %vm685, %v678
          %687 = vst.msk [vmem:[%s196 + $0x90] sm:$0xff] %vm683, %v680
          %688 = vst.msk [vmem:[%s196 + $0x98] sm:$0xff] %vm685, %v680
          %v689 = vld [vmem:[%s0 + $0x38] sm:$0xff]
          %v690 = vld [vmem:[%s0 + $0x78] sm:$0xff]
          %693 = vrot.lane.b32.xlu0 %v689, 24
          %v694 = vpop.permute.xlu0 %693
          %695 = vrot.lane.b32.xlu0 %v690, 24
          %v696 = vpop.permute.xlu0 %695
          %vm699 = vcmask 457920
          %700 = vst.msk [vmem:[%s196 + $0x40] sm:$0xff] %vm699, %v694
          %701 = vst.msk [vmem:[%s196 + $0x98] sm:$0xff] %vm699, %v696
          %v702 = vld [vmem:[%s0 + $0x38] sm:$0xff]
          %v703 = vld [vmem:[%s0 + $0x78] sm:$0xff]
          %706 = vrot.lane.b32.xlu0 %v702, 28
          %v707 = vpop.permute.xlu0 %706
          %708 = vrot.lane.b32.xlu0 %v703, 28
          %v709 = vpop.permute.xlu0 %708
          %vm712 = vcmask 753120
          %713 = vst.msk [vmem:[%s196 + $0x40] sm:$0xff] %vm712, %v707
          %714 = vst.msk [vmem:[%s196 + $0x98] sm:$0xff] %vm712, %v709
          %v715 = vld [vmem:[%s0 + $0x38] sm:$0xff]
          %v716 = vld [vmem:[%s0 + $0x78] sm:$0xff]
          %719 = vrot.lane.b32.xlu0 %v715, 32
          %v720 = vpop.permute.xlu0 %719
          %721 = vrot.lane.b32.xlu0 %v716, 32
          %v722 = vpop.permute.xlu0 %721
          %vm725 = vcmask 1048320
          %726 = vst.msk [vmem:[%s196 + $0x40] sm:$0xff] %vm725, %v720
          %727 = vst.msk [vmem:[%s196 + $0x98] sm:$0xff] %vm725, %v722
          %v728 = vld [vmem:[%s0 + $0x38] sm:$0xff]
          %v729 = vld [vmem:[%s0 + $0x78] sm:$0xff]
          %732 = vrot.lane.b32.xlu0 %v728, 36
          %v733 = vpop.permute.xlu0 %732
          %734 = vrot.lane.b32.xlu0 %v729, 36
          %v735 = vpop.permute.xlu0 %734
          %vm738 = vcmask 293920
          %739 = vst.msk [vmem:[%s196 + $0x48] sm:$0xff] %vm738, %v733
          %740 = vst.msk [vmem:[%s196 + $0xa0] sm:$0xff] %vm738, %v735
          %v741 = vld [vmem:[%s196] sm:$0xff]
          %v742 = vld [vmem:[%s196 + $0x8] sm:$0xff]
          %v743 = vld [vmem:[%s196 + $0x10] sm:$0xff]
          %v744 = vld [vmem:[%s196 + $0x18] sm:$0xff]
          %v745 = vld [vmem:[%s196 + $0x20] sm:$0xff]
          %v746 = vld [vmem:[%s196 + $0x28] sm:$0xff]
          %v747 = vld [vmem:[%s196 + $0x30] sm:$0xff]
          %v748 = vld [vmem:[%s196 + $0x38] sm:$0xff]
          %v749 = vld [vmem:[%s196 + $0x40] sm:$0xff]
          %v750 = vld [vmem:[%s196 + $0x48] sm:$0xff]
          %v751 = vld [vmem:[%s196 + $0x50] sm:$0xff]
          %v752 = vld [vmem:[%s196 + $0x58] sm:$0xff]
          %v753 = vld [vmem:[%s196 + $0x60] sm:$0xff]
          %v754 = vld [vmem:[%s196 + $0x68] sm:$0xff]
          %v755 = vld [vmem:[%s196 + $0x70] sm:$0xff]
          %v756 = vld [vmem:[%s196 + $0x78] sm:$0xff]
          %v757 = vld [vmem:[%s196 + $0x80] sm:$0xff]
          %v758 = vld [vmem:[%s196 + $0x88] sm:$0xff]
          %v759 = vld [vmem:[%s196 + $0x90] sm:$0xff]
          %v760 = vld [vmem:[%s196 + $0x98] sm:$0xff]
          %v761 = vld [vmem:[%s196 + $0xa0] sm:$0xff]
          %v762 = vld [vmem:[%s196 + $0xa8] sm:$0xff]
          %v763 = vld [vmem:[%s1] sm:$0xff]
          %v764 = vld [vmem:[%s1 + $0x8] sm:$0x7]
          %v765 = vmax.f32 %v741, %v743
          %v766 = vmax.f32 %v742, %v744
          %v767 = vmax.f32 %v765, %v745
          %v768 = vmax.f32 %v766, %v746
          %v769 = vmax.f32 %v767, %v747
          %v770 = vmax.f32 %v768, %v748
          %v771 = vmax.f32 %v769, %v749
          %v772 = vmax.f32 %v770, %v750
          %v773 = vsel %vm263, %v751, -inf
          %v774 = vmax.f32 %v771, %v773
          %v775 = vmax.f32 %v774, %v772
          %776 = vmax.xlane.f32.xlu0 %v775
          %v777 = vpop.xlane.xlu0 %776
          %v778 = vmax.f32 %v752, %v754
          %v779 = vmax.f32 %v753, %v755
          %v780 = vmax.f32 %v778, %v756
          %v781 = vmax.f32 %v779, %v757
          %v782 = vmax.f32 %v780, %v758
          %v783 = vmax.f32 %v781, %v759
          %v784 = vmax.f32 %v782, %v760
          %v785 = vmax.f32 %v783, %v761
          %v786 = vsel %vm263, %v762, -inf
          %v787 = vmax.f32 %v784, %v786
          %v788 = vmax.f32 %v787, %v785
          %789 = vmax.xlane.f32.xlu0 %v788
          %v790 = vpop.xlane.xlu0 %789
          %v791 = vlaneseq
          %v792 = vand.u32 %v791, 127
          %v793 = vadd.s32 %v792, 128
          %v794 = vadd.s32 %v792, 256
          %v795 = vadd.s32 %v792, 384
          %v796 = vadd.s32 %v792, 512
          %v797 = vadd.s32 %v792, 640
          %v798 = vadd.s32 %v792, 768
          %v799 = vadd.s32 %v792, 896
          %v800 = vadd.s32 %v792, 1024
          %v801 = vadd.s32 %v792, 1152
          %v802 = vadd.s32 %v792, 1280
          %vm803 = vcmp.eq.f32.partialorder %v741, %v777
          %vm804 = vcmp.eq.f32.partialorder %v742, %v777
          %vm805 = vcmp.eq.f32.partialorder %v743, %v777
          %vm806 = vcmp.eq.f32.partialorder %v744, %v777
          %vm807 = vcmp.eq.f32.partialorder %v745, %v777
          %vm808 = vcmp.eq.f32.partialorder %v746, %v777
          %vm809 = vcmp.eq.f32.partialorder %v747, %v777
          %vm810 = vcmp.eq.f32.partialorder %v748, %v777
          %vm811 = vcmp.eq.f32.partialorder %v749, %v777
          %vm812 = vcmp.eq.f32.partialorder %v750, %v777
          %vm813 = vcmp.eq.f32.partialorder %v751, %v777
          %vm814 = vcmp.eq.f32.partialorder %v752, %v790
          %vm815 = vcmp.eq.f32.partialorder %v753, %v790
          %vm816 = vcmp.eq.f32.partialorder %v754, %v790
          %vm817 = vcmp.eq.f32.partialorder %v755, %v790
          %vm818 = vcmp.eq.f32.partialorder %v756, %v790
          %vm819 = vcmp.eq.f32.partialorder %v757, %v790
          %vm820 = vcmp.eq.f32.partialorder %v758, %v790
          %vm821 = vcmp.eq.f32.partialorder %v759, %v790
          %vm822 = vcmp.eq.f32.partialorder %v760, %v790
          %vm823 = vcmp.eq.f32.partialorder %v761, %v790
          %vm824 = vcmp.eq.f32.partialorder %v762, %v790
          %v825 = vsel %vm803, %v792, 1296
          %v826 = vsel %vm804, %v793, 1296
          %v827 = vsel %vm805, %v794, 1296
          %v828 = vsel %vm806, %v795, 1296
          %v829 = vsel %vm807, %v796, 1296
          %v830 = vsel %vm808, %v797, 1296
          %v831 = vsel %vm809, %v798, 1296
          %v832 = vsel %vm810, %v799, 1296
          %v833 = vsel %vm811, %v800, 1296
          %v834 = vsel %vm812, %v801, 1296
          %v835 = vsel %vm813, %v802, 1296
          %v836 = vsel %vm814, %v792, 1296
          %v837 = vsel %vm815, %v793, 1296
          %v838 = vsel %vm816, %v794, 1296
          %v839 = vsel %vm817, %v795, 1296
          %v840 = vsel %vm818, %v796, 1296
          %v841 = vsel %vm819, %v797, 1296
          %v842 = vsel %vm820, %v798, 1296
          %v843 = vsel %vm821, %v799, 1296
          %v844 = vsel %vm822, %v800, 1296
          %v845 = vsel %vm823, %v801, 1296
          %v846 = vsel %vm824, %v802, 1296
          %vm847 = vcmp.lt.s32.totalorder %v825, %v827
          %v848 = vsel %vm847, %v825, %v827
          %vm849 = vcmp.lt.s32.totalorder %v826, %v828
          %v850 = vsel %vm849, %v826, %v828
          %vm851 = vcmp.lt.s32.totalorder %v848, %v829
          %v852 = vsel %vm851, %v848, %v829
          %vm853 = vcmp.lt.s32.totalorder %v850, %v830
          %v854 = vsel %vm853, %v850, %v830
          %vm855 = vcmp.lt.s32.totalorder %v852, %v831
          %v856 = vsel %vm855, %v852, %v831
          %vm857 = vcmp.lt.s32.totalorder %v854, %v832
          %v858 = vsel %vm857, %v854, %v832
          %vm859 = vcmp.lt.s32.totalorder %v856, %v833
          %v860 = vsel %vm859, %v856, %v833
          %vm861 = vcmp.lt.s32.totalorder %v858, %v834
          %v862 = vsel %vm861, %v858, %v834
          %v863 = vsel %vm263, %v835, 2147483647
          %vm864 = vcmp.lt.s32.totalorder %v860, %v863
          %v865 = vsel %vm864, %v860, %v863
          %vm866 = vcmp.lt.s32.totalorder %v865, %v862
          %v867 = vsel %vm866, %v865, %v862
          %v868 = vand.u32 %v867, 65535
          %v869 = vshra.s32 %v867, 16
          %v870 = vcvt.s32.f32 %v868
          %v871 = vcvt.s32.f32 %v869
          %872 = vmin.xlane.f32.xlu0 %v871
          %v873 = vpop.xlane.xlu0 %872
          %vm874 = vcmp.eq.f32.partialorder %v871, %v873
          %v875 = vsel %vm874, %v870, inf
          %876 = vmin.xlane.f32.xlu0 %v875
          %v877 = vpop.xlane.xlu0 %876
          %v878 = vcvt.f32.s32 %v877
          %v879 = vcvt.f32.s32 %v873
          %v880 = vshll.u32 %v879, 16
          %v881 = vadd.s32 %v880, %v878
          %vm882 = vcmp.lt.s32.totalorder %v836, %v838
          %v883 = vsel %vm882, %v836, %v838
          %vm884 = vcmp.lt.s32.totalorder %v837, %v839
          %v885 = vsel %vm884, %v837, %v839
          %vm886 = vcmp.lt.s32.totalorder %v883, %v840
          %v887 = vsel %vm886, %v883, %v840
          %vm888 = vcmp.lt.s32.totalorder %v885, %v841
          %v889 = vsel %vm888, %v885, %v841
          %vm890 = vcmp.lt.s32.totalorder %v887, %v842
          %v891 = vsel %vm890, %v887, %v842
          %vm892 = vcmp.lt.s32.totalorder %v889, %v843
          %v893 = vsel %vm892, %v889, %v843
          %vm894 = vcmp.lt.s32.totalorder %v891, %v844
          %v895 = vsel %vm894, %v891, %v844
          %vm896 = vcmp.lt.s32.totalorder %v893, %v845
          %v897 = vsel %vm896, %v893, %v845
          %v898 = vsel %vm263, %v846, 2147483647
          %vm899 = vcmp.lt.s32.totalorder %v895, %v898
          %v900 = vsel %vm899, %v895, %v898
          %vm901 = vcmp.lt.s32.totalorder %v900, %v897
          %v902 = vsel %vm901, %v900, %v897
          %v903 = vand.u32 %v902, 65535
          %v904 = vshra.s32 %v902, 16
          %v905 = vcvt.s32.f32 %v903
          %v906 = vcvt.s32.f32 %v904
          %907 = vmin.xlane.f32.xlu0 %v906
          %v908 = vpop.xlane.xlu0 %907
          %vm909 = vcmp.eq.f32.partialorder %v906, %v908
          %v910 = vsel %vm909, %v905, inf
          %911 = vmin.xlane.f32.xlu0 %v910
          %v912 = vpop.xlane.xlu0 %911
          %v913 = vcvt.f32.s32 %v912
          %v914 = vcvt.f32.s32 %v908
          %v915 = vshll.u32 %v914, 16
          %v916 = vadd.s32 %v915, %v913
          %vm917 = vcmp.eq.s32.totalorder %v792, %v881
          %vm918 = vcmp.eq.s32.totalorder %v793, %v881
          %vm919 = vcmp.eq.s32.totalorder %v794, %v881
          %vm920 = vcmp.eq.s32.totalorder %v795, %v881
          %vm921 = vcmp.eq.s32.totalorder %v796, %v881
          %vm922 = vcmp.eq.s32.totalorder %v797, %v881
          %vm923 = vcmp.eq.s32.totalorder %v798, %v881
          %vm924 = vcmp.eq.s32.totalorder %v799, %v881
          %vm925 = vcmp.eq.s32.totalorder %v800, %v881
          %vm926 = vcmp.eq.s32.totalorder %v801, %v881
          %vm927 = vcmp.eq.s32.totalorder %v802, %v881
          %vm928 = vcmp.eq.s32.totalorder %v792, %v916
          %vm929 = vcmp.eq.s32.totalorder %v793, %v916
          %vm930 = vcmp.eq.s32.totalorder %v794, %v916
          %vm931 = vcmp.eq.s32.totalorder %v795, %v916
          %vm932 = vcmp.eq.s32.totalorder %v796, %v916
          %vm933 = vcmp.eq.s32.totalorder %v797, %v916
          %vm934 = vcmp.eq.s32.totalorder %v798, %v916
          %vm935 = vcmp.eq.s32.totalorder %v799, %v916
          %vm936 = vcmp.eq.s32.totalorder %v800, %v916
          %vm937 = vcmp.eq.s32.totalorder %v801, %v916
          %vm938 = vcmp.eq.s32.totalorder %v802, %v916
          %v941 = vperm.slane %v763, 0
          %v942 = vperm.slane %v763, 1
          %v943 = vperm.slane %v763, 2
          %v944 = vperm.slane %v763, 3
          %v945 = vperm.slane %v763, 4
          %v946 = vperm.slane %v763, 5
          %v947 = vperm.slane %v763, 6
          %v948 = vperm.slane %v763, 7
          %v949 = vperm.slane %v764, 0
          %v950 = vperm.slane %v764, 1
          %v951 = vperm.slane %v764, 2
          %v963 = vsel %vm917, %v941, 0.0
          %v964 = vsel %vm918, %v942, 0.0
          %v965 = vsel %vm919, %v943, 0.0
          %v966 = vsel %vm920, %v944, 0.0
          %v967 = vsel %vm921, %v945, 0.0
          %v968 = vsel %vm922, %v946, 0.0
          %v969 = vsel %vm923, %v947, 0.0
          %v970 = vsel %vm924, %v948, 0.0
          %v971 = vsel %vm925, %v949, 0.0
          %v972 = vsel %vm926, %v950, 0.0
          %v973 = vsel %vm927, %v951, 0.0
          %v974 = vsel %vm928, %v941, 0.0
          %v975 = vsel %vm929, %v942, 0.0
          %v976 = vsel %vm930, %v943, 0.0
          %v977 = vsel %vm931, %v944, 0.0
          %v978 = vsel %vm932, %v945, 0.0
          %v979 = vsel %vm933, %v946, 0.0
          %v980 = vsel %vm934, %v947, 0.0
          %v981 = vsel %vm935, %v948, 0.0
          %v982 = vsel %vm936, %v949, 0.0
          %v983 = vsel %vm937, %v950, 0.0
          %v984 = vsel %vm938, %v951, 0.0
          %v985 = vadd.f32 %v963, %v964
          %v986 = vadd.f32 %v985, %v965
          %v987 = vadd.f32 %v986, %v966
          %v988 = vadd.f32 %v987, %v967
          %v989 = vadd.f32 %v988, %v968
          %v990 = vadd.f32 %v989, %v969
          %v991 = vadd.f32 %v990, %v970
          %v992 = vadd.f32 %v991, %v971
          %v993 = vadd.f32 %v992, %v972
          %v994 = vsel %vm263, %v973, 0.0
          %v995 = vadd.f32 %v993, %v994
          %996 = vadd.xlane.f32.xlu0 %v995
          %v997 = vpop.xlane.xlu0 %996
          %v998 = vadd.f32 %v974, %v975
          %v999 = vadd.f32 %v998, %v976
          %v1000 = vadd.f32 %v999, %v977
          %v1001 = vadd.f32 %v1000, %v978
          %v1002 = vadd.f32 %v1001, %v979
          %v1003 = vadd.f32 %v1002, %v980
          %v1004 = vadd.f32 %v1003, %v981
          %v1005 = vadd.f32 %v1004, %v982
          %v1006 = vadd.f32 %v1005, %v983
          %v1007 = vsel %vm263, %v984, 0.0
          %v1008 = vadd.f32 %v1006, %v1007
          %1009 = vadd.xlane.f32.xlu0 %v1008
          %v1010 = vpop.xlane.xlu0 %1009
          %v1011 = vadd.f32 %v741, %v997
          %v1012 = vadd.f32 %v742, %v997
          %v1013 = vadd.f32 %v743, %v997
          %v1014 = vadd.f32 %v744, %v997
          %v1015 = vadd.f32 %v745, %v997
          %v1016 = vadd.f32 %v746, %v997
          %v1017 = vadd.f32 %v747, %v997
          %v1018 = vadd.f32 %v748, %v997
          %v1019 = vadd.f32 %v749, %v997
          %v1020 = vadd.f32 %v750, %v997
          %v1021 = vadd.f32 %v751, %v997
          %v1022 = vadd.f32 %v752, %v1010
          %v1023 = vadd.f32 %v753, %v1010
          %v1024 = vadd.f32 %v754, %v1010
          %v1025 = vadd.f32 %v755, %v1010
          %v1026 = vadd.f32 %v756, %v1010
          %v1027 = vadd.f32 %v757, %v1010
          %v1028 = vadd.f32 %v758, %v1010
          %v1029 = vadd.f32 %v759, %v1010
          %v1030 = vadd.f32 %v760, %v1010
          %v1031 = vadd.f32 %v761, %v1010
          %v1032 = vadd.f32 %v762, %v1010
          %1033 = vst [vmem:[%s196] sm:$0xff] %v1011
          %1034 = vst [vmem:[%s196 + $0x8] sm:$0xff] %v1012
          %1035 = vst [vmem:[%s196 + $0x10] sm:$0xff] %v1013
          %1036 = vst [vmem:[%s196 + $0x18] sm:$0xff] %v1014
          %1037 = vst [vmem:[%s196 + $0x20] sm:$0xff] %v1015
          %1038 = vst [vmem:[%s196 + $0x28] sm:$0xff] %v1016
          %1039 = vst [vmem:[%s196 + $0x30] sm:$0xff] %v1017
          %1040 = vst [vmem:[%s196 + $0x38] sm:$0xff] %v1018
          %1041 = vst [vmem:[%s196 + $0x40] sm:$0xff] %v1019
          %1042 = vst [vmem:[%s196 + $0x48] sm:$0xff] %v1020
          %1043 = vst.msk [vmem:[%s196 + $0x50] sm:$0xff] %vm263, %v1021
          %1044 = vst [vmem:[%s196 + $0x58] sm:$0xff] %v1022
          %1045 = vst [vmem:[%s196 + $0x60] sm:$0xff] %v1023
          %1046 = vst [vmem:[%s196 + $0x68] sm:$0xff] %v1024
          %1047 = vst [vmem:[%s196 + $0x70] sm:$0xff] %v1025
          %1048 = vst [vmem:[%s196 + $0x78] sm:$0xff] %v1026
          %1049 = vst [vmem:[%s196 + $0x80] sm:$0xff] %v1027
          %1050 = vst [vmem:[%s196 + $0x88] sm:$0xff] %v1028
          %1051 = vst [vmem:[%s196 + $0x90] sm:$0xff] %v1029
          %1052 = vst [vmem:[%s196 + $0x98] sm:$0xff] %v1030
          %1053 = vst [vmem:[%s196 + $0xa0] sm:$0xff] %v1031
          %1054 = vst.msk [vmem:[%s196 + $0xa8] sm:$0xff] %vm263, %v1032
          %vm1077 = vcmask 1041408
          %v1078 = vrot.slane %v1011, 6
          %v1079 = vrot.slane %v1012, 6
          %v1080 = vrot.slane %v1013, 6
          %v1081 = vrot.slane %v1014, 6
          %v1082 = vrot.slane %v1015, 6
          %v1083 = vrot.slane %v1016, 6
          %v1084 = vrot.slane %v1017, 6
          %v1085 = vrot.slane %v1018, 6
          %v1086 = vrot.slane %v1019, 6
          %v1087 = vrot.slane %v1020, 6
          %v1088 = vrot.slane %v1021, 6
          %v1089 = vrot.slane %v1022, 6
          %v1090 = vsel %vm1077, %v1078, %v1089
          %v1091 = vrot.slane %v1023, 6
          %v1092 = vsel %vm1077, %v1079, %v1091
          %v1093 = vrot.slane %v1024, 6
          %v1094 = vsel %vm1077, %v1080, %v1093
          %v1095 = vrot.slane %v1025, 6
          %v1096 = vsel %vm1077, %v1081, %v1095
          %v1097 = vrot.slane %v1026, 6
          %v1098 = vsel %vm1077, %v1082, %v1097
          %v1099 = vrot.slane %v1027, 6
          %v1100 = vsel %vm1077, %v1083, %v1099
          %v1101 = vrot.slane %v1028, 6
          %v1102 = vsel %vm1077, %v1084, %v1101
          %v1103 = vrot.slane %v1029, 6
          %v1104 = vsel %vm1077, %v1085, %v1103
          %v1105 = vrot.slane %v1030, 6
          %v1106 = vsel %vm1077, %v1086, %v1105
          %v1107 = vrot.slane %v1031, 6
          %v1108 = vsel %vm1077, %v1087, %v1107
          %v1109 = vrot.slane %v1032, 6
          %v1110 = vsel %vm1077, %v1088, %v1109
          %1144 = vst [vmem:[%s196 + $0xb0] sm:$0xfc] %v1078
          %1145 = vst [vmem:[%s196 + $0xb8] sm:$0xfc] %v1079
          %1146 = vst [vmem:[%s196 + $0xc0] sm:$0xfc] %v1080
          %1147 = vst [vmem:[%s196 + $0xc8] sm:$0xfc] %v1081
          %1148 = vst [vmem:[%s196 + $0xd0] sm:$0xfc] %v1082
          %1149 = vst [vmem:[%s196 + $0xd8] sm:$0xfc] %v1083
          %1150 = vst [vmem:[%s196 + $0xe0] sm:$0xfc] %v1084
          %1151 = vst [vmem:[%s196 + $0xe8] sm:$0xfc] %v1085
          %1152 = vst [vmem:[%s196 + $0xf0] sm:$0xfc] %v1086
          %1153 = vst [vmem:[%s196 + $0xf8] sm:$0xfc] %v1087
          %vm1154 = vcmask 130050
          %1155 = vst.msk [vmem:[%s196 + $0x100] sm:$0xfc] %vm1154, %v1088
          %1156 = vst [vmem:[%s196 + $0x108] sm:$0xff] %v1090
          %1157 = vst [vmem:[%s196 + $0x110] sm:$0xff] %v1092
          %1158 = vst [vmem:[%s196 + $0x118] sm:$0xff] %v1094
          %1159 = vst [vmem:[%s196 + $0x120] sm:$0xff] %v1096
          %1160 = vst [vmem:[%s196 + $0x128] sm:$0xff] %v1098
          %1161 = vst [vmem:[%s196 + $0x130] sm:$0xff] %v1100
          %1162 = vst [vmem:[%s196 + $0x138] sm:$0xff] %v1102
          %1163 = vst [vmem:[%s196 + $0x140] sm:$0xff] %v1104
          %1164 = vst [vmem:[%s196 + $0x148] sm:$0xff] %v1106
          %1165 = vst [vmem:[%s196 + $0x150] sm:$0xff] %v1108
          %1166 = vst.msk [vmem:[%s196 + $0x158] sm:$0xff] %vm263, %v1110
          %1167 = vst [vmem:[%s196 + $0x160] sm:$0x3] %v1089
          %1168 = vst [vmem:[%s196 + $0x168] sm:$0x3] %v1091
          %1169 = vst [vmem:[%s196 + $0x170] sm:$0x3] %v1093
          %1170 = vst [vmem:[%s196 + $0x178] sm:$0x3] %v1095
          %1171 = vst [vmem:[%s196 + $0x180] sm:$0x3] %v1097
          %1172 = vst [vmem:[%s196 + $0x188] sm:$0x3] %v1099
          %1173 = vst [vmem:[%s196 + $0x190] sm:$0x3] %v1101
          %1174 = vst [vmem:[%s196 + $0x198] sm:$0x3] %v1103
          %1175 = vst [vmem:[%s196 + $0x1a0] sm:$0x3] %v1105
          %1176 = vst [vmem:[%s196 + $0x1a8] sm:$0x3] %v1107
          %vm1177 = vcmask 123904
          %1178 = vst.msk [vmem:[%s196 + $0x1b0] sm:$0x3] %vm1177, %v1109
        $region40: #{forward.1} parent=31 // pred_fallthru
          _
        %s1179 = smul.u32 5, %s17
        %p1180 = scmp.lt.s32.totalorder %s1179, 14
        %s1181 = scalar_select %p1180, %s1179, 14
        %s1182 = smul.addr %s1181, 11
        %s1183 = smul.addr %s1182, 8
        %s1184 = scalar_lea.vmem %s3, %s1183
        // Predicated region
        $region41: #{forward.1} parent=31 // pred_check
          %p1185 = pneg %p103
        $region42: #{forward.1} parent=31 // pred_check_branch
          %1187 = sbr.rel (%p1185) target = $region44
        $region43: #{forward.1} parent=31 // pred_region
          %s1188 = smul.u32 5, %s17
        $region44: #{forward.1} parent=31 // pred_fallthru
          _
      $region32: #{forward.1} parent=5 // pred_fallthru
        _
      %p1189 = scmp.le.s32.totalorder 2, %s12
      // Predicated region
      $region45: #{forward.1} parent=5 // pred_check
        %p1190 = pneg %p1189
      $region46: #{forward.1} parent=5 // pred_check_branch
        %1192 = sbr.rel (%p1190) target = $region48
      $region47: #{forward.1} parent=5 // pred_region
        %s1193 = ssub.s32 %s12, 2
        // Predicated region
        $region49: #{forward.1} parent=47 // pred_check
          %p1194 = pneg %p109
        $region50: #{forward.1} parent=47 // pred_check_branch
          %1196 = sbr.rel (%p1194) target = $region52
        $region51: #{forward.1} parent=47 // pred_region
          %s1197 = smul.u32 5, %s18
          %p1198 = scmp.lt.s32.totalorder %s1197, 14
          %s1199 = scalar_select %p1198, %s1197, 14
          %s1200 = smul.addr %s1199, 11
          %s1201 = smul.addr %s1200, 8
          %s1202 = scalar_lea.vmem %s3, %s1201
        $region52: #{forward.1} parent=47 // pred_fallthru
          _
      $region48: #{forward.1} parent=5 // pred_fallthru
        _
    $region6: #{forward.1} parent=1 // loop_footer
      %s16 = sadd.s32 1, %s12
    $region7: #{forward.1} parent=1 // loop_footer_branch
      %11 = sbr.rel target = $region3
    $region8: #{forward.1} parent=1 // loop_exit
      _
    %1203 = vsyncpa [#allocation3], 1
    %s1204 = scalar_lea.sflag [#allocation3], 1
    %1205 = vsyncpa %s1204, 1

</llo_original>
